<compile_context>
chip_gen: v7x
topology: tpu7x:2x2x1
jax: 0.10.0
libtpu: 0.0.40
codegen_flags: <defaults>
</compile_context>

<pallas_src>
import functools
import math

import jax
import jax.numpy as jnp
from jax.experimental import pallas as pl
from jax.experimental.pallas import tpu as pltpu


def _round_up(x, m):
    return ((x + m - 1) // m) * m


def _mmha_kernel(q_ref, k_ref, v_ref, wo_ref, bo_ref, o_ref, s_ref, ctx_ref,
                 *, num_heads, compute_dtype, approx_recip):
    # q_ref  : (1, tq,  Td)   Q tile, un-split (lane-dense)
    # k_ref  : (1, tkv, Td)   K tile, un-split (lane-dense, no host transpose)
    # v_ref  : (1, tkv, Td)   V tile, un-split (lane-dense)
    # wo_ref : (Td, Td)       W_out^T (compute_dtype)
    # bo_ref : (1, Td)        b_out (f32)
    # o_ref  : (1, tq, Td)    output tile (f32)
    # s_ref  : VMEM (H, tq, tkv) f32   per-head scores -> probabilities
    # ctx_ref: VMEM (tq, Td)   f32     concatenated per-head context accumulator
    H = num_heads
    Td = q_ref.shape[-1]
    Dk = Td // H
    inv_sqrt_dk = 1.0 / math.sqrt(Dk)
    kv = pl.program_id(2)

    @pl.when(kv == 0)
    def _():
        ctx_ref[...] = jnp.zeros_like(ctx_ref)

    # ---- per-head Q_h @ K_h^T, written straight into the VMEM score scratch.
    # Contraction is on the Dk axis of both operands (A @ B^T form), so K is
    # consumed in its natural (tkv, Td) lane-dense layout.
    for h in range(H):
        q_h = q_ref[0, :, h * Dk:(h + 1) * Dk].astype(compute_dtype)
        k_h = k_ref[0, :, h * Dk:(h + 1) * Dk].astype(compute_dtype)
        s_ref[h] = jax.lax.dot_general(
            q_h, k_h, (((1,), (1,)), ((), ())),
            preferred_element_type=jnp.float32)                    # (tq, tkv)

    # ---- softmax over the HEAD axis (torch.softmax(..., dim=1)).
    # The 1/sqrt(Dk) temperature is folded into the exp argument (max over
    # heads commutes with the positive scale), and the exp overwrites the
    # score scratch in place.
    s = s_ref[...]                                                 # (H, tq, tkv)
    m = jnp.max(s, axis=0, keepdims=True)
    e = jnp.exp((s - m) * inv_sqrt_dk)
    s_ref[...] = e
    inv = pl.reciprocal(jnp.sum(e, axis=0), approx=approx_recip)   # (tq, tkv)

    # ---- P_h @ V_h accumulated into the concatenated (tq, Td) context.
    # (Per-head RMW keeps live values bounded to (tq, Dk); stores are masked
    #  when Dk < 128 -- acceptable, see review note.)
    for h in range(H):
        p_h = (s_ref[h] * inv).astype(compute_dtype)
        v_h = v_ref[0, :, h * Dk:(h + 1) * Dk].astype(compute_dtype)
        ctx_ref[:, h * Dk:(h + 1) * Dk] += jnp.dot(
            p_h, v_h, preferred_element_type=jnp.float32)

    # ---- single Td-deep output projection + bias, once per (b, q-tile).
    @pl.when(kv == pl.num_programs(2) - 1)
    def _():
        o_ref[0] = (jnp.dot(ctx_ref[...].astype(compute_dtype), wo_ref[...],
                            preferred_element_type=jnp.float32)
                    + bo_ref[...])


def masked_multi_head_attention(Q, K, V, mask, params, num_heads,
                                q_block=256, kv_block=256,
                                compute_dtype=jnp.bfloat16,
                                approx_reciprocal=True):
    """Q, K, V: (B, S, t_d) float32.  mask: unused (matches reference forward)."""
    del mask  # unused in the reference forward
    B, S, Td = Q.shape
    H = num_heads
    assert Td % H == 0

    # Sublane-aligned tiles, capped by the (padded) sequence length.
    tq = min(_round_up(q_block, 8), _round_up(S, 8))
    tkv = min(_round_up(kv_block, 8), _round_up(S, 8))
    Sq = _round_up(S, tq)
    Skv = _round_up(S, tkv)

    # Ragged-S handling: pad.  Padded query rows are sliced off the output.
    # Padded key/value rows are exactly neutral because the softmax is over
    # the head axis (never normalizes over k) and padded V rows are zero, so
    # their contribution to the context accumulation is zero.
    if Sq != S:
        Q = jnp.pad(Q, ((0, 0), (0, Sq - S), (0, 0)))
    if Skv != S:
        K = jnp.pad(K, ((0, 0), (0, Skv - S), (0, 0)))
        V = jnp.pad(V, ((0, 0), (0, Skv - S), (0, 0)))

    wo_t = params['w_out_w'].T.astype(compute_dtype)     # (Td, Td): y = x @ W^T + b
    bo = params['w_out_b'].reshape(1, Td).astype(jnp.float32)

    grid = (B, Sq // tq, Skv // tkv)
    # v7x: make batch the megacore-split axis so both TensorCores do not
    # stream the same K/V blocks; kv is the reduction axis -> "arbitrary".
    if B > 1:
        dim_sem = ("parallel", "arbitrary", "arbitrary")
    else:
        dim_sem = ("parallel", "parallel", "arbitrary")

    kernel = functools.partial(_mmha_kernel, num_heads=H,
                               compute_dtype=compute_dtype,
                               approx_recip=approx_reciprocal)

    out = pl.pallas_call(
        kernel,
        out_shape=jax.ShapeDtypeStruct((B, Sq, Td), jnp.float32),
        grid_spec=pltpu.PrefetchScalarGridSpec(
            num_scalar_prefetch=0,
            grid=grid,
            in_specs=[
                pl.BlockSpec((1, tq, Td), lambda b, qi, ki: (b, qi, 0)),   # Q
                pl.BlockSpec((1, tkv, Td), lambda b, qi, ki: (b, ki, 0)),  # K
                pl.BlockSpec((1, tkv, Td), lambda b, qi, ki: (b, ki, 0)),  # V
                # Constant index_map -> fetched once, never re-DMA'd per step.
                pl.BlockSpec((Td, Td), lambda b, qi, ki: (0, 0)),          # W_out^T
                pl.BlockSpec((1, Td), lambda b, qi, ki: (0, 0)),           # b_out
            ],
            out_specs=pl.BlockSpec((1, tq, Td), lambda b, qi, ki: (b, qi, 0)),
            scratch_shapes=[
                pltpu.VMEM((H, tq, tkv), jnp.float32),   # per-head scores/probs
                pltpu.VMEM((tq, Td), jnp.float32),       # concatenated context acc
            ],
        ),
        compiler_params=pltpu.CompilerParams(
            dimension_semantics=dim_sem,
            vmem_limit_bytes=48 * 1024 * 1024,
        ),
    )(Q, K, V, wo_t, bo)

    return out[:, :S, :] if Sq != S else out


def init_params(key, t_d):
    """Deterministic nn.Linear-style init (U[-1/sqrt(fan_in), 1/sqrt(fan_in)])."""
    bound = 1.0 / math.sqrt(t_d)
    names = ['w_query', 'w_key', 'w_val', 'w_out']
    keys = jax.random.split(key, 2 * len(names))
    params = {}
    for i, n in enumerate(names):
        params[f'{n}_w'] = jax.random.uniform(
            keys[2 * i], (t_d, t_d), jnp.float32, -bound, bound)
        params[f'{n}_b'] = jax.random.uniform(
            keys[2 * i + 1], (t_d,), jnp.float32, -bound, bound)
    # NOTE: w_query/w_key/w_val exist only to mirror __init__; the reference
    # forward never applies them.
    return params


def reference_forward(Q, K, V, mask, params, num_heads):
    """Pure-JAX mirror of the (interpreted) reference forward, for checking."""
    del mask
    B, S, Td = Q.shape
    H = num_heads
    Dk = Td // H
    q = Q.reshape(B, S, H, Dk).transpose(0, 2, 1, 3)
    k = K.reshape(B, S, H, Dk).transpose(0, 2, 1, 3)
    v = V.reshape(B, S, H, Dk).transpose(0, 2, 1, 3)
    scores = jnp.einsum('bhqd,bhkd->bhqk', q, k) / math.sqrt(Dk)
    probs = jax.nn.softmax(scores, axis=1)          # dim=1 -> head axis
    out = jnp.einsum('bhqk,bhkd->bhqd', probs, v)
    out = out.transpose(0, 2, 1, 3).reshape(B, S, Td)
    return out @ params['w_out_w'].T + params['w_out_b']


if __name__ == '__main__':
    B, S, num_heads, t_d = 2, 20, 4, 32

    key = jax.random.PRNGKey(0)
    kq, kk, kv, kp = jax.random.split(key, 4)
    Q = jax.random.normal(kq, (B, S, t_d), jnp.float32)
    K = jax.random.normal(kk, (B, S, t_d), jnp.float32)
    V = jax.random.normal(kv, (B, S, t_d), jnp.float32)
    mask = jnp.ones((B, 1, S, S), jnp.float32)      # unused, as in reference
    params = init_params(kp, t_d)

    ref = reference_forward(Q, K, V, mask, params, num_heads)

    # 1) f32 / exact-reciprocal config with small blocks: forces a multi-tile
    #    grid (2 batches x 3 q-tiles x 2 kv-tiles) with both query- and
    #    kv-padding, validating the kv-accumulation structure at tight tol.
    out_f32 = masked_multi_head_attention(
        Q, K, V, mask, params, num_heads, q_block=8, kv_block=16,
        compute_dtype=jnp.float32, approx_reciprocal=False)
    out_f32 = jax.block_until_ready(out_f32)
    assert out_f32.shape == (B, S, t_d)
    assert jnp.allclose(out_f32, ref, atol=1e-5, rtol=1e-5), (
        f"f32 max abs err {jnp.max(jnp.abs(out_f32 - ref))}")

    # 2) performance config (bf16 MXU operands + approx reciprocal): looser
    #    tolerance per review.
    out_bf16 = masked_multi_head_attention(
        Q, K, V, mask, params, num_heads,
        compute_dtype=jnp.bfloat16, approx_reciprocal=True)
    out_bf16 = jax.block_until_ready(out_bf16)
    assert out_bf16.shape == (B, S, t_d)
    assert jnp.allclose(out_bf16, ref, atol=5e-2, rtol=5e-2), (
        f"bf16 max abs err {jnp.max(jnp.abs(out_bf16 - ref))}")

    print("KERNEL_OK")
</pallas_src>

<mosaic_0001>
module attributes {stable_mosaic.version = 11 : i64} {
  func.func @_mmha_kernel(%arg0: i32, %arg1: i32, %arg2: i32, %arg3: memref<1x8x32xf32, #tpu.memory_space<vmem>>, %arg4: memref<1x16x32xf32, #tpu.memory_space<vmem>>, %arg5: memref<1x16x32xf32, #tpu.memory_space<vmem>>, %arg6: memref<32x32xf32, #tpu.memory_space<vmem>>, %arg7: memref<1x32xf32, #tpu.memory_space<vmem>>, %arg8: memref<1x8x32xf32, #tpu.memory_space<vmem>>, %arg9: memref<4x8x16xf32, #tpu.memory_space<vmem>>, %arg10: memref<8x32xf32, #tpu.memory_space<vmem>>) attributes {dimension_semantics = [#tpu.dimension_semantics<parallel>, #tpu.dimension_semantics<arbitrary>, #tpu.dimension_semantics<arbitrary>], iteration_bounds = array<i64: 2, 3, 2>, scalar_prefetch = 0 : i64, scratch_operands = 2 : i64, tpu.core_type = #tpu.core_type<tc>, window_params = [{transform_indices = @transform_0, window_bounds = array<i64: 1, 8, 32>}, {transform_indices = @transform_1, window_bounds = array<i64: 1, 16, 32>}, {transform_indices = @transform_2, window_bounds = array<i64: 1, 16, 32>}, {pipeline_mode = #tpu.pipeline_mode<synchronous>, transform_indices = @transform_3, window_bounds = array<i64: 32, 32>}, {pipeline_mode = #tpu.pipeline_mode<synchronous>, transform_indices = @transform_4, window_bounds = array<i64: 1, 32>}, {transform_indices = @transform_5, window_bounds = array<i64: 1, 8, 32>}]} {
    %c0_i32 = arith.constant 0 : i32
    %0 = arith.cmpi eq, %arg2, %c0_i32 : i32
    %1 = arith.extui %0 : i1 to i32
    %c0_i32_0 = arith.constant 0 : i32
    %2 = arith.cmpi ne, %1, %c0_i32_0 : i32
    scf.if %2 {
      %cst_87 = arith.constant 0.000000e+00 : f32
      %85 = vector.broadcast %cst_87 : f32 to vector<8x32xf32>
      %c0_88 = arith.constant 0 : index
      %c0_89 = arith.constant 0 : index
      %86 = vector.load %arg10[%c0_88, %c0_89] : memref<8x32xf32, #tpu.memory_space<vmem>>, vector<8x32xf32>
      tpu.vector_store %arg10[%c0_88, %c0_89], %85 {strides = array<i32>} : memref<8x32xf32, #tpu.memory_space<vmem>>, vector<8x32xf32>,
    } else {
    }
    %c0 = arith.constant 0 : index
    %c0_1 = arith.constant 0 : index
    %c0_2 = arith.constant 0 : index
    %3 = vector.load %arg3[%c0, %c0_1, %c0_2] : memref<1x8x32xf32, #tpu.memory_space<vmem>>, vector<1x8x8xf32>
    %4 = vector.shape_cast %3 : vector<1x8x8xf32> to vector<8x8xf32>
    %c0_3 = arith.constant 0 : index
    %c0_4 = arith.constant 0 : index
    %c0_5 = arith.constant 0 : index
    %5 = vector.load %arg4[%c0_3, %c0_4, %c0_5] : memref<1x16x32xf32, #tpu.memory_space<vmem>>, vector<1x16x8xf32>
    %6 = vector.shape_cast %5 : vector<1x16x8xf32> to vector<16x8xf32>
    %cst = arith.constant dense<0.000000e+00> : vector<8x16xf32>
    %7 = tpu.matmul %4, %6, %cst {dimension_numbers = #tpu.dot_dimension_numbers<[1], [1], [0], [0], [0, 0, 1, 0], [], []>} : vector<8x8xf32>, vector<16x8xf32>, vector<8x16xf32> -> vector<8x16xf32>
    %c0_6 = arith.constant 0 : index
    %c0_7 = arith.constant 0 : index
    %c0_8 = arith.constant 0 : index
    %8 = vector.load %arg9[%c0_6, %c0_7, %c0_8] : memref<4x8x16xf32, #tpu.memory_space<vmem>>, vector<1x8x16xf32>
    %9 = vector.shape_cast %8 : vector<1x8x16xf32> to vector<8x16xf32>
    %10 = vector.shape_cast %7 : vector<8x16xf32> to vector<1x8x16xf32>
    tpu.vector_store %arg9[%c0_6, %c0_7, %c0_8], %10 {strides = array<i32>} : memref<4x8x16xf32, #tpu.memory_space<vmem>>, vector<1x8x16xf32>,
    %c0_9 = arith.constant 0 : index
    %c0_10 = arith.constant 0 : index
    %c8 = arith.constant 8 : index
    %11 = vector.load %arg3[%c0_9, %c0_10, %c8] : memref<1x8x32xf32, #tpu.memory_space<vmem>>, vector<1x8x8xf32>
    %12 = vector.shape_cast %11 : vector<1x8x8xf32> to vector<8x8xf32>
    %c0_11 = arith.constant 0 : index
    %c0_12 = arith.constant 0 : index
    %c8_13 = arith.constant 8 : index
    %13 = vector.load %arg4[%c0_11, %c0_12, %c8_13] : memref<1x16x32xf32, #tpu.memory_space<vmem>>, vector<1x16x8xf32>
    %14 = vector.shape_cast %13 : vector<1x16x8xf32> to vector<16x8xf32>
    %cst_14 = arith.constant dense<0.000000e+00> : vector<8x16xf32>
    %15 = tpu.matmul %12, %14, %cst_14 {dimension_numbers = #tpu.dot_dimension_numbers<[1], [1], [0], [0], [0, 0, 1, 0], [], []>} : vector<8x8xf32>, vector<16x8xf32>, vector<8x16xf32> -> vector<8x16xf32>
    %c1 = arith.constant 1 : index
    %c0_15 = arith.constant 0 : index
    %c0_16 = arith.constant 0 : index
    %16 = vector.load %arg9[%c1, %c0_15, %c0_16] : memref<4x8x16xf32, #tpu.memory_space<vmem>>, vector<1x8x16xf32>
    %17 = vector.shape_cast %16 : vector<1x8x16xf32> to vector<8x16xf32>
    %18 = vector.shape_cast %15 : vector<8x16xf32> to vector<1x8x16xf32>
    tpu.vector_store %arg9[%c1, %c0_15, %c0_16], %18 {strides = array<i32>} : memref<4x8x16xf32, #tpu.memory_space<vmem>>, vector<1x8x16xf32>,
    %c0_17 = arith.constant 0 : index
    %c0_18 = arith.constant 0 : index
    %c16 = arith.constant 16 : index
    %19 = vector.load %arg3[%c0_17, %c0_18, %c16] : memref<1x8x32xf32, #tpu.memory_space<vmem>>, vector<1x8x8xf32>
    %20 = vector.shape_cast %19 : vector<1x8x8xf32> to vector<8x8xf32>
    %c0_19 = arith.constant 0 : index
    %c0_20 = arith.constant 0 : index
    %c16_21 = arith.constant 16 : index
    %21 = vector.load %arg4[%c0_19, %c0_20, %c16_21] : memref<1x16x32xf32, #tpu.memory_space<vmem>>, vector<1x16x8xf32>
    %22 = vector.shape_cast %21 : vector<1x16x8xf32> to vector<16x8xf32>
    %cst_22 = arith.constant dense<0.000000e+00> : vector<8x16xf32>
    %23 = tpu.matmul %20, %22, %cst_22 {dimension_numbers = #tpu.dot_dimension_numbers<[1], [1], [0], [0], [0, 0, 1, 0], [], []>} : vector<8x8xf32>, vector<16x8xf32>, vector<8x16xf32> -> vector<8x16xf32>
    %c2 = arith.constant 2 : index
    %c0_23 = arith.constant 0 : index
    %c0_24 = arith.constant 0 : index
    %24 = vector.load %arg9[%c2, %c0_23, %c0_24] : memref<4x8x16xf32, #tpu.memory_space<vmem>>, vector<1x8x16xf32>
    %25 = vector.shape_cast %24 : vector<1x8x16xf32> to vector<8x16xf32>
    %26 = vector.shape_cast %23 : vector<8x16xf32> to vector<1x8x16xf32>
    tpu.vector_store %arg9[%c2, %c0_23, %c0_24], %26 {strides = array<i32>} : memref<4x8x16xf32, #tpu.memory_space<vmem>>, vector<1x8x16xf32>,
    %c0_25 = arith.constant 0 : index
    %c0_26 = arith.constant 0 : index
    %c24 = arith.constant 24 : index
    %27 = vector.load %arg3[%c0_25, %c0_26, %c24] : memref<1x8x32xf32, #tpu.memory_space<vmem>>, vector<1x8x8xf32>
    %28 = vector.shape_cast %27 : vector<1x8x8xf32> to vector<8x8xf32>
    %c0_27 = arith.constant 0 : index
    %c0_28 = arith.constant 0 : index
    %c24_29 = arith.constant 24 : index
    %29 = vector.load %arg4[%c0_27, %c0_28, %c24_29] : memref<1x16x32xf32, #tpu.memory_space<vmem>>, vector<1x16x8xf32>
    %30 = vector.shape_cast %29 : vector<1x16x8xf32> to vector<16x8xf32>
    %cst_30 = arith.constant dense<0.000000e+00> : vector<8x16xf32>
    %31 = tpu.matmul %28, %30, %cst_30 {dimension_numbers = #tpu.dot_dimension_numbers<[1], [1], [0], [0], [0, 0, 1, 0], [], []>} : vector<8x8xf32>, vector<16x8xf32>, vector<8x16xf32> -> vector<8x16xf32>
    %c3 = arith.constant 3 : index
    %c0_31 = arith.constant 0 : index
    %c0_32 = arith.constant 0 : index
    %32 = vector.load %arg9[%c3, %c0_31, %c0_32] : memref<4x8x16xf32, #tpu.memory_space<vmem>>, vector<1x8x16xf32>
    %33 = vector.shape_cast %32 : vector<1x8x16xf32> to vector<8x16xf32>
    %34 = vector.shape_cast %31 : vector<8x16xf32> to vector<1x8x16xf32>
    tpu.vector_store %arg9[%c3, %c0_31, %c0_32], %34 {strides = array<i32>} : memref<4x8x16xf32, #tpu.memory_space<vmem>>, vector<1x8x16xf32>,
    %c0_33 = arith.constant 0 : index
    %c0_34 = arith.constant 0 : index
    %c0_35 = arith.constant 0 : index
    %35 = vector.load %arg9[%c0_33, %c0_34, %c0_35] : memref<4x8x16xf32, #tpu.memory_space<vmem>>, vector<4x8x16xf32>
    %cst_36 = arith.constant dense<0xFF800000> : vector<8x16xf32>
    %36 = vector.multi_reduction <maximumf>, %35, %cst_36 [0] : vector<4x8x16xf32> to vector<8x16xf32>
    %37 = vector.shape_cast %36 : vector<8x16xf32> to vector<1x8x16xf32>
    %38 = vector.broadcast %37 : vector<1x8x16xf32> to vector<4x8x16xf32>
    %39 = arith.subf %35, %38 : vector<4x8x16xf32>
    %cst_37 = arith.constant 0.353553385 : f32
    %40 = vector.broadcast %cst_37 : f32 to vector<4x8x16xf32>
    %41 = arith.mulf %39, %40 : vector<4x8x16xf32>
    %42 = math.exp %41 : vector<4x8x16xf32>
    %c0_38 = arith.constant 0 : index
    %c0_39 = arith.constant 0 : index
    %c0_40 = arith.constant 0 : index
    %43 = vector.load %arg9[%c0_38, %c0_39, %c0_40] : memref<4x8x16xf32, #tpu.memory_space<vmem>>, vector<4x8x16xf32>
    tpu.vector_store %arg9[%c0_38, %c0_39, %c0_40], %42 {strides = array<i32>} : memref<4x8x16xf32, #tpu.memory_space<vmem>>, vector<4x8x16xf32>,
    %cst_41 = arith.constant dense<0.000000e+00> : vector<8x16xf32>
    %44 = vector.multi_reduction <add>, %42, %cst_41 [0] : vector<4x8x16xf32> to vector<8x16xf32>
    %45 = tpu.reciprocal %44 : vector<8x16xf32> -> vector<8x16xf32>
    %c0_42 = arith.constant 0 : index
    %c0_43 = arith.constant 0 : index
    %c0_44 = arith.constant 0 : index
    %46 = vector.load %arg9[%c0_42, %c0_43, %c0_44] : memref<4x8x16xf32, #tpu.memory_space<vmem>>, vector<1x8x16xf32>
    %47 = vector.shape_cast %46 : vector<1x8x16xf32> to vector<8x16xf32>
    %48 = arith.mulf %47, %45 : vector<8x16xf32>
    %c0_45 = arith.constant 0 : index
    %c0_46 = arith.constant 0 : index
    %c0_47 = arith.constant 0 : index
    %49 = vector.load %arg5[%c0_45, %c0_46, %c0_47] : memref<1x16x32xf32, #tpu.memory_space<vmem>>, vector<1x16x8xf32>
    %50 = vector.shape_cast %49 : vector<1x16x8xf32> to vector<16x8xf32>
    %c0_48 = arith.constant 0 : index
    %c0_49 = arith.constant 0 : index
    %51 = vector.load %arg10[%c0_48, %c0_49] : memref<8x32xf32, #tpu.memory_space<vmem>>, vector<8x8xf32>
    %cst_50 = arith.constant dense<0.000000e+00> : vector<8x8xf32>
    %52 = tpu.matmul %48, %50, %cst_50 {dimension_numbers = #tpu.dot_dimension_numbers<[1], [0], [0], [1], [0, 0, 1, 1], [], []>} : vector<8x16xf32>, vector<16x8xf32>, vector<8x8xf32> -> vector<8x8xf32>
    %53 = arith.addf %51, %52 : vector<8x8xf32>
    %c0_51 = arith.constant 0 : index
    %c0_52 = arith.constant 0 : index
    %54 = vector.load %arg10[%c0_51, %c0_52] : memref<8x32xf32, #tpu.memory_space<vmem>>, vector<8x8xf32>
    tpu.vector_store %arg10[%c0_51, %c0_52], %53 {strides = array<i32>} : memref<8x32xf32, #tpu.memory_space<vmem>>, vector<8x8xf32>,
    %c1_53 = arith.constant 1 : index
    %c0_54 = arith.constant 0 : index
    %c0_55 = arith.constant 0 : index
    %55 = vector.load %arg9[%c1_53, %c0_54, %c0_55] : memref<4x8x16xf32, #tpu.memory_space<vmem>>, vector<1x8x16xf32>
    %56 = vector.shape_cast %55 : vector<1x8x16xf32> to vector<8x16xf32>
    %57 = arith.mulf %56, %45 : vector<8x16xf32>
    %c0_56 = arith.constant 0 : index
    %c0_57 = arith.constant 0 : index
    %c8_58 = arith.constant 8 : index
    %58 = vector.load %arg5[%c0_56, %c0_57, %c8_58] : memref<1x16x32xf32, #tpu.memory_space<vmem>>, vector<1x16x8xf32>
    %59 = vector.shape_cast %58 : vector<1x16x8xf32> to vector<16x8xf32>
    %c0_59 = arith.constant 0 : index
    %c8_60 = arith.constant 8 : index
    %60 = vector.load %arg10[%c0_59, %c8_60] : memref<8x32xf32, #tpu.memory_space<vmem>>, vector<8x8xf32>
    %cst_61 = arith.constant dense<0.000000e+00> : vector<8x8xf32>
    %61 = tpu.matmul %57, %59, %cst_61 {dimension_numbers = #tpu.dot_dimension_numbers<[1], [0], [0], [1], [0, 0, 1, 1], [], []>} : vector<8x16xf32>, vector<16x8xf32>, vector<8x8xf32> -> vector<8x8xf32>
    %62 = arith.addf %60, %61 : vector<8x8xf32>
    %c0_62 = arith.constant 0 : index
    %c8_63 = arith.constant 8 : index
    %63 = vector.load %arg10[%c0_62, %c8_63] : memref<8x32xf32, #tpu.memory_space<vmem>>, vector<8x8xf32>
    tpu.vector_store %arg10[%c0_62, %c8_63], %62 {strides = array<i32>} : memref<8x32xf32, #tpu.memory_space<vmem>>, vector<8x8xf32>,
    %c2_64 = arith.constant 2 : index
    %c0_65 = arith.constant 0 : index
    %c0_66 = arith.constant 0 : index
    %64 = vector.load %arg9[%c2_64, %c0_65, %c0_66] : memref<4x8x16xf32, #tpu.memory_space<vmem>>, vector<1x8x16xf32>
    %65 = vector.shape_cast %64 : vector<1x8x16xf32> to vector<8x16xf32>
    %66 = arith.mulf %65, %45 : vector<8x16xf32>
    %c0_67 = arith.constant 0 : index
    %c0_68 = arith.constant 0 : index
    %c16_69 = arith.constant 16 : index
    %67 = vector.load %arg5[%c0_67, %c0_68, %c16_69] : memref<1x16x32xf32, #tpu.memory_space<vmem>>, vector<1x16x8xf32>
    %68 = vector.shape_cast %67 : vector<1x16x8xf32> to vector<16x8xf32>
    %c0_70 = arith.constant 0 : index
    %c16_71 = arith.constant 16 : index
    %69 = vector.load %arg10[%c0_70, %c16_71] : memref<8x32xf32, #tpu.memory_space<vmem>>, vector<8x8xf32>
    %cst_72 = arith.constant dense<0.000000e+00> : vector<8x8xf32>
    %70 = tpu.matmul %66, %68, %cst_72 {dimension_numbers = #tpu.dot_dimension_numbers<[1], [0], [0], [1], [0, 0, 1, 1], [], []>} : vector<8x16xf32>, vector<16x8xf32>, vector<8x8xf32> -> vector<8x8xf32>
    %71 = arith.addf %69, %70 : vector<8x8xf32>
    %c0_73 = arith.constant 0 : index
    %c16_74 = arith.constant 16 : index
    %72 = vector.load %arg10[%c0_73, %c16_74] : memref<8x32xf32, #tpu.memory_space<vmem>>, vector<8x8xf32>
    tpu.vector_store %arg10[%c0_73, %c16_74], %71 {strides = array<i32>} : memref<8x32xf32, #tpu.memory_space<vmem>>, vector<8x8xf32>,
    %c3_75 = arith.constant 3 : index
    %c0_76 = arith.constant 0 : index
    %c0_77 = arith.constant 0 : index
    %73 = vector.load %arg9[%c3_75, %c0_76, %c0_77] : memref<4x8x16xf32, #tpu.memory_space<vmem>>, vector<1x8x16xf32>
    %74 = vector.shape_cast %73 : vector<1x8x16xf32> to vector<8x16xf32>
    %75 = arith.mulf %74, %45 : vector<8x16xf32>
    %c0_78 = arith.constant 0 : index
    %c0_79 = arith.constant 0 : index
    %c24_80 = arith.constant 24 : index
    %76 = vector.load %arg5[%c0_78, %c0_79, %c24_80] : memref<1x16x32xf32, #tpu.memory_space<vmem>>, vector<1x16x8xf32>
    %77 = vector.shape_cast %76 : vector<1x16x8xf32> to vector<16x8xf32>
    %c0_81 = arith.constant 0 : index
    %c24_82 = arith.constant 24 : index
    %78 = vector.load %arg10[%c0_81, %c24_82] : memref<8x32xf32, #tpu.memory_space<vmem>>, vector<8x8xf32>
    %cst_83 = arith.constant dense<0.000000e+00> : vector<8x8xf32>
    %79 = tpu.matmul %75, %77, %cst_83 {dimension_numbers = #tpu.dot_dimension_numbers<[1], [0], [0], [1], [0, 0, 1, 1], [], []>} : vector<8x16xf32>, vector<16x8xf32>, vector<8x8xf32> -> vector<8x8xf32>
    %80 = arith.addf %78, %79 : vector<8x8xf32>
    %c0_84 = arith.constant 0 : index
    %c24_85 = arith.constant 24 : index
    %81 = vector.load %arg10[%c0_84, %c24_85] : memref<8x32xf32, #tpu.memory_space<vmem>>, vector<8x8xf32>
    tpu.vector_store %arg10[%c0_84, %c24_85], %80 {strides = array<i32>} : memref<8x32xf32, #tpu.memory_space<vmem>>, vector<8x8xf32>,
    %c1_i32 = arith.constant 1 : i32
    %82 = arith.cmpi eq, %arg2, %c1_i32 : i32
    %83 = arith.extui %82 : i1 to i32
    %c0_i32_86 = arith.constant 0 : i32
    %84 = arith.cmpi ne, %83, %c0_i32_86 : i32
    scf.if %84 {
      %c0_87 = arith.constant 0 : index
      %c0_88 = arith.constant 0 : index
      %85 = vector.load %arg10[%c0_87, %c0_88] : memref<8x32xf32, #tpu.memory_space<vmem>>, vector<8x32xf32>
      %c0_89 = arith.constant 0 : index
      %c0_90 = arith.constant 0 : index
      %86 = vector.load %arg6[%c0_89, %c0_90] : memref<32x32xf32, #tpu.memory_space<vmem>>, vector<32x32xf32>
      %cst_91 = arith.constant dense<0.000000e+00> : vector<8x32xf32>
      %87 = tpu.matmul %85, %86, %cst_91 {dimension_numbers = #tpu.dot_dimension_numbers<[1], [0], [0], [1], [0, 0, 1, 1], [], []>} : vector<8x32xf32>, vector<32x32xf32>, vector<8x32xf32> -> vector<8x32xf32>
      %c0_92 = arith.constant 0 : index
      %c0_93 = arith.constant 0 : index
      %88 = vector.load %arg7[%c0_92, %c0_93] : memref<1x32xf32, #tpu.memory_space<vmem>>, vector<1x32xf32>
      %89 = vector.broadcast %88 : vector<1x32xf32> to vector<8x32xf32>
      %90 = arith.addf %87, %89 : vector<8x32xf32>
      %c0_94 = arith.constant 0 : index
      %c0_95 = arith.constant 0 : index
      %c0_96 = arith.constant 0 : index
      %91 = vector.load %arg8[%c0_94, %c0_95, %c0_96] : memref<1x8x32xf32, #tpu.memory_space<vmem>>, vector<1x8x32xf32>
      %92 = vector.shape_cast %91 : vector<1x8x32xf32> to vector<8x32xf32>
      %93 = vector.shape_cast %90 : vector<8x32xf32> to vector<1x8x32xf32>
      tpu.vector_store %arg8[%c0_94, %c0_95, %c0_96], %93 {strides = array<i32>} : memref<1x8x32xf32, #tpu.memory_space<vmem>>, vector<1x8x32xf32>,
    } else {
    }
    return
  }
  func.func @transform_0(%arg0: i32, %arg1: i32, %arg2: i32) -> (i32, i32, i32) {
    %c0_i32 = arith.constant 0 : i32
    %c0_i32_0 = arith.constant 0 : i32
    return %arg0, %arg1, %c0_i32 : i32, i32, i32
  }
  func.func @transform_1(%arg0: i32, %arg1: i32, %arg2: i32) -> (i32, i32, i32) {
    %c0_i32 = arith.constant 0 : i32
    %c0_i32_0 = arith.constant 0 : i32
    return %arg0, %arg2, %c0_i32 : i32, i32, i32
  }
  func.func @transform_2(%arg0: i32, %arg1: i32, %arg2: i32) -> (i32, i32, i32) {
    %c0_i32 = arith.constant 0 : i32
    %c0_i32_0 = arith.constant 0 : i32
    return %arg0, %arg2, %c0_i32 : i32, i32, i32
  }
  func.func @transform_3(%arg0: i32, %arg1: i32, %arg2: i32) -> (i32, i32) {
    %c0_i32 = arith.constant 0 : i32
    %c0_i32_0 = arith.constant 0 : i32
    %c0_i32_1 = arith.constant 0 : i32
    return %c0_i32, %c0_i32_0 : i32, i32
  }
  func.func @transform_4(%arg0: i32, %arg1: i32, %arg2: i32) -> (i32, i32) {
    %c0_i32 = arith.constant 0 : i32
    %c0_i32_0 = arith.constant 0 : i32
    %c0_i32_1 = arith.constant 0 : i32
    return %c0_i32, %c0_i32_0 : i32, i32
  }
  func.func @transform_5(%arg0: i32, %arg1: i32, %arg2: i32) -> (i32, i32, i32) {
    %c0_i32 = arith.constant 0 : i32
    %c0_i32_0 = arith.constant 0 : i32
    return %arg0, %arg1, %c0_i32 : i32, i32, i32
  }
}

</mosaic_0001>

<llo_original>
// kernel: tpu_custom_call.1
$region0: #{tpu_custom_call.1}
  #allocation0 [shape = 'u32[]', space=smem, size = 0x4, offset = 0x4, fixed_abs, tag = 'smem constant byte address 0x4 - core index']
  #allocation1 [shape = 'u32[144,128]{1,0:T(1,128)}', space=vmem, size = 0x12000, scoped, tag = 'internal scratch']
  #allocation2 [shape = 'f32[4,8,16]{2,1,0:T(8,128)}', space=vmem, size = 0x4000, scoped, tag = 'scratch operand']
  #allocation3 [shape = 'f32[8,32]{1,0:T(8,128)}', space=vmem, size = 0x1000, scoped, tag = 'scratch operand']
  %s0 = inlined_call_operand.hbm [shape: f32[2,24,32], index: 0, kind: input, shape index: {}]
  %s1 = inlined_call_operand.hbm [shape: f32[2,32,32], index: 1, kind: input, shape index: {}]
  %s2 = inlined_call_operand.hbm [shape: f32[2,32,32], index: 2, kind: input, shape index: {}]
  %s3 = inlined_call_operand.hbm [shape: f32[32,32], index: 3, kind: input, shape index: {}]
  %s4 = inlined_call_operand.vmem [shape: f32[1,32], index: 4, kind: input, shape index: {}]
  %s5 = inlined_call_operand.hbm [shape: f32[2,24,32], index: 5, kind: output, shape index: {}]
  %s6 = sld [smem:[#allocation0]]
  $region77: #{tpu_custom_call.1} parent=0
    _
  %s8 = ssub.s32 1, %s6
  %s9 = scalar_select 0, %s8, %s6
  $region1: #{tpu_custom_call.1} parent=0
    #allocation4 [shape = 'u8[8192]{0}', space=vmem, size = 0x2000, scoped, tag = 'input window, operand 0']
    #allocation5 [shape = 's32[2]{0}', space=sflag, size = 0x8, scoped, tag = 'scoped memory for tpu_custom_call.1']
    #allocation6 [shape = 's32[2]{0}', space=sflag, size = 0x8, scoped, tag = 'scoped memory for tpu_custom_call.1']
    #allocation7 [shape = 'u8[16384]{0}', space=vmem, size = 0x4000, scoped, tag = 'input window, operand 1']
    #allocation8 [shape = 's32[2]{0}', space=sflag, size = 0x8, scoped, tag = 'scoped memory for tpu_custom_call.1']
    #allocation9 [shape = 'u8[16384]{0}', space=vmem, size = 0x4000, scoped, tag = 'input window, operand 2']
    #allocation10 [shape = 'u8[16384]{0}', space=vmem, size = 0x4000, scoped, tag = 'input window, operand 3, single buffered']
    #allocation11 [shape = 's32[1]{0}', space=sflag, size = 0x4, scoped, tag = 'scoped memory for tpu_custom_call.1']
    #allocation12 [shape = 'u8[8192]{0}', space=vmem, size = 0x2000, scoped, tag = 'output window, operand 0']
    %10 = vsyncpa [#allocation5], 0
    %s11 = scalar_lea.sflag [#allocation5], 1
    %12 = vsyncpa %s11, 0
    %13 = vsyncpa [#allocation8], 0
    %s14 = scalar_lea.sflag [#allocation8], 1
    %15 = vsyncpa %s14, 0
    %16 = vsyncpa [#allocation11], 0
    %17 = vsyncpa [#allocation6], 0
    %s18 = scalar_lea.sflag [#allocation6], 1
    %19 = vsyncpa %s18, 0
    loop: start=0, step=1, limit=14
    $region2: #{tpu_custom_call.1} parent=1 // loop_pre_header
      _
    $region3: #{tpu_custom_call.1} parent=1 // loop_header
      %s21 = sphi 0, %s25
      %p22 = scmp.ge.s32.totalorder %s21, 14
      %s28 = sphi 0, %s47
      %s29 = sphi 0, %s43
      %s30 = sphi 0, %s39
      %s31 = sphi 0, %s28
      %s32 = sphi 0, %s29
      %s33 = sphi 0, %s30
      %s34 = sphi 0, %s31
      %s35 = sphi 0, %s32
      %s36 = sphi 0, %s33
      %s52 = sphi 0, %s54
      %s55 = sphi 0, %s52
      %s56 = sphi 0, %s55
      %s72 = sphi 0, %s56
      %s80 = sphi 0, %s82
      %s83 = sphi 0, %s80
      %s84 = sphi 0, %s83
      %s100 = sphi 0, %s84
      %s108 = sphi 0, %s110
      %s111 = sphi 0, %s108
      %s112 = sphi 0, %s111
      %s128 = sphi 0, %s112
      %s132 = sphi 0, %s132
      %s134 = sphi 0, %s132
      %s135 = sphi 0, %s134
      %s149 = sphi 0, %s135
      %s153 = sphi 0, %s153
      %s155 = sphi 0, %s153
      %s156 = sphi 0, %s155
      %s170 = sphi 0, %s156
      %s178 = sphi 0, %s180
      %s181 = sphi 0, %s178
      %s182 = sphi 0, %s181
      %s198 = sphi 0, %s182
    $region4: #{tpu_custom_call.1} parent=1 // loop_header_branch
      %24 = sbr.rel (%p22) target = $region8
    $region5: #{tpu_custom_call.1} parent=1 // loop_body
      %s26 = ssub.s32 %s21, 1
      %s27 = ssub.s32 %s21, 2
      %s37 = sadd.s32 1, %s30
      %p38 = scmp.ge.s32.totalorder %s37, 2
      %s39 = scalar_select %p38, 0, %s37
      %s40 = sadd.s32 1, %s29
      %s41 = scalar_select %p38, %s40, %s29
      %p42 = scmp.ge.s32.totalorder %s41, 3
      %s43 = scalar_select %p42, 0, %s41
      %s44 = sadd.s32 1, %s28
      %s45 = scalar_select %p42, %s44, %s28
      %p46 = scmp.ge.s32.totalorder %s45, 2
      %s47 = scalar_select %p46, 0, %s45
      %s48 = ssub.s32 %s28, %s47
      %s49 = ssub.s32 %s29, %s43
      %s50 = sor.u32 %s48, %s49
      %p51 = scmp.eq.s32.totalorder %s50, 0
      %s53 = sadd.s32 %s52, 1
      %s54 = scalar_select %p51, %s52, %s53
      %p57 = pneg %p51
      %p58 = scmp.eq.s32.totalorder %s21, 11
      %p59 = por %p57, %p58
      %p60 = scmp.ne.s32.totalorder %s52, %s55
      %p61 = scmp.eq.s32.totalorder %s21, 0
      %p62 = por %p60, %p61
      %p63 = scmp.ne.s32.totalorder %s52, %s55
      %p64 = scmp.eq.s32.totalorder %s26, 11
      %p65 = por %p63, %p64
      %p66 = scmp.ne.s32.totalorder %s55, %s56
      %p67 = scmp.eq.s32.totalorder %s26, 0
      %p68 = por %p66, %p67
      %p69 = scmp.ne.s32.totalorder %s55, %s56
      %p70 = scmp.eq.s32.totalorder %s27, 11
      %p71 = por %p69, %p70
      %p73 = scmp.ne.s32.totalorder %s56, %s72
      %p74 = scmp.eq.s32.totalorder %s27, 0
      %p75 = por %p73, %p74
      %s76 = ssub.s32 %s28, %s47
      %s77 = ssub.s32 %s30, %s39
      %s78 = sor.u32 %s76, %s77
      %p79 = scmp.eq.s32.totalorder %s78, 0
      %s81 = sadd.s32 %s80, 1
      %s82 = scalar_select %p79, %s80, %s81
      %p85 = pneg %p79
      %p86 = scmp.eq.s32.totalorder %s21, 11
      %p87 = por %p85, %p86
      %p88 = scmp.ne.s32.totalorder %s80, %s83
      %p89 = scmp.eq.s32.totalorder %s21, 0
      %p90 = por %p88, %p89
      %p91 = scmp.ne.s32.totalorder %s80, %s83
      %p92 = scmp.eq.s32.totalorder %s26, 11
      %p93 = por %p91, %p92
      %p94 = scmp.ne.s32.totalorder %s83, %s84
      %p95 = scmp.eq.s32.totalorder %s26, 0
      %p96 = por %p94, %p95
      %p97 = scmp.ne.s32.totalorder %s83, %s84
      %p98 = scmp.eq.s32.totalorder %s27, 11
      %p99 = por %p97, %p98
      %p101 = scmp.ne.s32.totalorder %s84, %s100
      %p102 = scmp.eq.s32.totalorder %s27, 0
      %p103 = por %p101, %p102
      %s104 = ssub.s32 %s28, %s47
      %s105 = ssub.s32 %s30, %s39
      %s106 = sor.u32 %s104, %s105
      %p107 = scmp.eq.s32.totalorder %s106, 0
      %s109 = sadd.s32 %s108, 1
      %s110 = scalar_select %p107, %s108, %s109
      %p113 = pneg %p107
      %p114 = scmp.eq.s32.totalorder %s21, 11
      %p115 = por %p113, %p114
      %p116 = scmp.ne.s32.totalorder %s108, %s111
      %p117 = scmp.eq.s32.totalorder %s21, 0
      %p118 = por %p116, %p117
      %p119 = scmp.ne.s32.totalorder %s108, %s111
      %p120 = scmp.eq.s32.totalorder %s26, 11
      %p121 = por %p119, %p120
      %p122 = scmp.ne.s32.totalorder %s111, %s112
      %p123 = scmp.eq.s32.totalorder %s26, 0
      %p124 = por %p122, %p123
      %p125 = scmp.ne.s32.totalorder %s111, %s112
      %p126 = scmp.eq.s32.totalorder %s27, 11
      %p127 = por %p125, %p126
      %p129 = scmp.ne.s32.totalorder %s112, %s128
      %p130 = scmp.eq.s32.totalorder %s27, 0
      %p131 = por %p129, %p130
      %s133 = sadd.s32 %s132, 1
      %p136 = scmp.eq.s32.totalorder %s21, 11
      %p137 = scmp.ne.s32.totalorder %s132, %s134
      %p138 = scmp.eq.s32.totalorder %s21, 0
      %p139 = por %p137, %p138
      %p140 = scmp.ne.s32.totalorder %s132, %s134
      %p141 = scmp.eq.s32.totalorder %s26, 11
      %p142 = por %p140, %p141
      %p143 = scmp.ne.s32.totalorder %s134, %s135
      %p144 = scmp.eq.s32.totalorder %s26, 0
      %p145 = por %p143, %p144
      %p146 = scmp.ne.s32.totalorder %s134, %s135
      %p147 = scmp.eq.s32.totalorder %s27, 11
      %p148 = por %p146, %p147
      %p150 = scmp.ne.s32.totalorder %s135, %s149
      %p151 = scmp.eq.s32.totalorder %s27, 0
      %p152 = por %p150, %p151
      %s154 = sadd.s32 %s153, 1
      %p157 = scmp.eq.s32.totalorder %s21, 11
      %p158 = scmp.ne.s32.totalorder %s153, %s155
      %p159 = scmp.eq.s32.totalorder %s21, 0
      %p160 = por %p158, %p159
      %p161 = scmp.ne.s32.totalorder %s153, %s155
      %p162 = scmp.eq.s32.totalorder %s26, 11
      %p163 = por %p161, %p162
      %p164 = scmp.ne.s32.totalorder %s155, %s156
      %p165 = scmp.eq.s32.totalorder %s26, 0
      %p166 = por %p164, %p165
      %p167 = scmp.ne.s32.totalorder %s155, %s156
      %p168 = scmp.eq.s32.totalorder %s27, 11
      %p169 = por %p167, %p168
      %p171 = scmp.ne.s32.totalorder %s156, %s170
      %p172 = scmp.eq.s32.totalorder %s27, 0
      %p173 = por %p171, %p172
      %s174 = ssub.s32 %s28, %s47
      %s175 = ssub.s32 %s29, %s43
      %s176 = sor.u32 %s174, %s175
      %p177 = scmp.eq.s32.totalorder %s176, 0
      %s179 = sadd.s32 %s178, 1
      %s180 = scalar_select %p177, %s178, %s179
      %p183 = pneg %p177
      %p184 = scmp.eq.s32.totalorder %s21, 11
      %p185 = por %p183, %p184
      %p186 = scmp.ne.s32.totalorder %s178, %s181
      %p187 = scmp.eq.s32.totalorder %s21, 0
      %p188 = por %p186, %p187
      %p189 = scmp.ne.s32.totalorder %s178, %s181
      %p190 = scmp.eq.s32.totalorder %s26, 11
      %p191 = por %p189, %p190
      %p192 = scmp.ne.s32.totalorder %s181, %s182
      %p193 = scmp.eq.s32.totalorder %s26, 0
      %p194 = por %p192, %p193
      %p195 = scmp.ne.s32.totalorder %s181, %s182
      %p196 = scmp.eq.s32.totalorder %s27, 11
      %p197 = por %p195, %p196
      %p199 = scmp.ne.s32.totalorder %s182, %s198
      %p200 = scmp.eq.s32.totalorder %s27, 0
      %p201 = por %p199, %p200
      %p202 = scmp.le.s32.totalorder 1, %s21
      %p203 = scmp.lt.s32.totalorder %s21, 13
      %p204 = pnand %p202, %p203
      %p205 = pneg %p204
      // Predicated region
      $region9: #{tpu_custom_call.1} parent=5 // pred_check
        _
      $region10: #{tpu_custom_call.1} parent=5 // pred_check_branch
        %207 = sbr.rel (%p204) target = $region12
      $region11: #{tpu_custom_call.1} parent=5 // pred_region
        %s208 = ssub.s32 %s21, 1
        // Predicated region
        $region13: #{tpu_custom_call.1} parent=11 // pred_check
          %p209 = pneg %p145
        $region14: #{tpu_custom_call.1} parent=11 // pred_check_branch
          %211 = sbr.rel (%p209) target = $region16
        $region15: #{tpu_custom_call.1} parent=11 // pred_region
          %s213 = ssub.s32 512, 512
          %214 = vsyncadd [#allocation11], %s213
          %s215 = sshll.u32 [#allocation10], 4
          %s216 = int_to_ptr.vmem [resolvable:$true] %s215
          %221 = dma.hbm_to_vmem [thread:$0]  %s3, 512, %s216, [#allocation11], 128, 128, 8
        $region16: #{tpu_custom_call.1} parent=11 // pred_fallthru
          _
        // Predicated region
        $region17: #{tpu_custom_call.1} parent=11 // pred_check
          %p222 = pneg %p166
        $region18: #{tpu_custom_call.1} parent=11 // pred_check_branch
          %224 = sbr.rel (%p222) target = $region20
        $region19: #{tpu_custom_call.1} parent=11 // pred_region
          _
        $region20: #{tpu_custom_call.1} parent=11 // pred_fallthru
          _
      $region12: #{tpu_custom_call.1} parent=5 // pred_fallthru
        _
      %p225 = scmp.lt.s32.totalorder %s21, 12
      // Predicated region
      $region21: #{tpu_custom_call.1} parent=5 // pred_check
        %p226 = pneg %p225
      $region22: #{tpu_custom_call.1} parent=5 // pred_check_branch
        %228 = sbr.rel (%p226) target = $region24
      $region23: #{tpu_custom_call.1} parent=5 // pred_region
        // Predicated region
        $region25: #{tpu_custom_call.1} parent=23 // pred_check
          %p229 = pneg %p62
        $region26: #{tpu_custom_call.1} parent=23 // pred_check_branch
          %231 = sbr.rel (%p229) target = $region28
        $region27: #{tpu_custom_call.1} parent=23 // pred_region
          %s232 = sand.u32 %s52, 1
          %s233 = scalar_lea.sflag [#allocation5], %s232
          %s234 = sand.u32 %s52, 1
          %s235 = smul.addr %s234, 8
          %s236 = scalar_lea.vmem [#allocation4], %s235
          %s238 = ssub.s32 128, 128
          %239 = vsyncadd %s233, %s238
          %s240 = smul.addr %s28, 3
          %s241 = sadd.s32 %s29, %s240
          %s242 = smul.addr %s241, 128
          %s243 = scalar_lea.hbm %s0, %s242
          %s245 = sshll.u32 %s236, 4
          %s246 = int_to_ptr.vmem [resolvable:$true] %s245
          %248 = dma.hbm_to_vmem [thread:$0]  %s243, 128, %s246, %s233
        $region28: #{tpu_custom_call.1} parent=23 // pred_fallthru
          _
        // Predicated region
        $region29: #{tpu_custom_call.1} parent=23 // pred_check
          %p249 = pneg %p90
        $region30: #{tpu_custom_call.1} parent=23 // pred_check_branch
          %251 = sbr.rel (%p249) target = $region32
        $region31: #{tpu_custom_call.1} parent=23 // pred_region
          %s252 = sand.u32 %s21, 1
          %s253 = scalar_lea.sflag [#allocation8], %s252
          %s254 = sand.u32 %s80, 1
          %s255 = smul.addr %s254, 16
          %s256 = scalar_lea.vmem [#allocation7], %s255
          %s257 = smul.u32 2, %s30
          %s259 = ssub.s32 256, 256
          %260 = vsyncadd %s253, %s259
          %s261 = smul.addr %s28, 4
          %s262 = sadd.s32 %s257, %s261
          %s263 = smul.addr %s262, 128
          %s264 = scalar_lea.hbm %s1, %s263
          %s265 = sshll.u32 %s256, 4
          %s266 = int_to_ptr.vmem [resolvable:$true] %s265
          %271 = dma.hbm_to_vmem [thread:$0]  %s264, 256, %s266, %s253, 128, 128, 8
        $region32: #{tpu_custom_call.1} parent=23 // pred_fallthru
          _
        // Predicated region
        $region33: #{tpu_custom_call.1} parent=23 // pred_check
          %p272 = pneg %p118
        $region34: #{tpu_custom_call.1} parent=23 // pred_check_branch
          %274 = sbr.rel (%p272) target = $region36
        $region35: #{tpu_custom_call.1} parent=23 // pred_region
          %s275 = sand.u32 %s21, 1
          %s276 = scalar_lea.sflag [#allocation8], %s275
          %s277 = sand.u32 %s108, 1
          %s278 = smul.addr %s277, 16
          %s279 = scalar_lea.vmem [#allocation9], %s278
          %s280 = smul.u32 2, %s30
          %s282 = ssub.s32 256, 256
          %283 = vsyncadd %s276, %s282
          %s284 = smul.addr %s28, 4
          %s285 = sadd.s32 %s280, %s284
          %s286 = smul.addr %s285, 128
          %s287 = scalar_lea.hbm %s2, %s286
          %s288 = sshll.u32 %s279, 4
          %s289 = int_to_ptr.vmem [resolvable:$true] %s288
          %294 = dma.hbm_to_vmem [thread:$0]  %s287, 256, %s289, %s276, 128, 128, 8
        $region36: #{tpu_custom_call.1} parent=23 // pred_fallthru
          _
      $region24: #{tpu_custom_call.1} parent=5 // pred_fallthru
        _
      %p295 = scmp.le.s32.totalorder 1, %s21
      %p296 = scmp.lt.s32.totalorder %s21, 13
      %p297 = pnand %p295, %p296
      %p298 = pneg %p297
      // Predicated region
      $region37: #{tpu_custom_call.1} parent=5 // pred_check
        _
      $region38: #{tpu_custom_call.1} parent=5 // pred_check_branch
        %300 = sbr.rel (%p297) target = $region40
      $region39: #{tpu_custom_call.1} parent=5 // pred_region
        %s301 = ssub.s32 %s21, 1
        %s302 = sand.u32 %s55, 1
        %s303 = scalar_lea.sflag [#allocation5], %s302
        %s304 = sand.u32 %s55, 1
        %s305 = smul.addr %s304, 8
        %s306 = scalar_lea.vmem [#allocation4], %s305
        // Predicated region
        $region41: #{tpu_custom_call.1} parent=39 // pred_check
          %p307 = pneg %p68
        $region42: #{tpu_custom_call.1} parent=39 // pred_check_branch
          %309 = sbr.rel (%p307) target = $region44
        $region43: #{tpu_custom_call.1} parent=39 // pred_region
          %310 = dma.done %s303, 128
        $region44: #{tpu_custom_call.1} parent=39 // pred_fallthru
          _
        %s311 = sand.u32 %s26, 1
        %s312 = scalar_lea.sflag [#allocation8], %s311
        %s313 = sand.u32 %s83, 1
        %s314 = smul.addr %s313, 16
        %s315 = scalar_lea.vmem [#allocation7], %s314
        // Predicated region
        $region45: #{tpu_custom_call.1} parent=39 // pred_check
          %p316 = pneg %p96
        $region46: #{tpu_custom_call.1} parent=39 // pred_check_branch
          %318 = sbr.rel (%p316) target = $region48
        $region47: #{tpu_custom_call.1} parent=39 // pred_region
          %319 = dma.done %s312, 256
        $region48: #{tpu_custom_call.1} parent=39 // pred_fallthru
          _
        %s320 = sand.u32 %s26, 1
        %s321 = scalar_lea.sflag [#allocation8], %s320
        %s322 = sand.u32 %s111, 1
        %s323 = smul.addr %s322, 16
        %s324 = scalar_lea.vmem [#allocation9], %s323
        // Predicated region
        $region49: #{tpu_custom_call.1} parent=39 // pred_check
          %p325 = pneg %p124
        $region50: #{tpu_custom_call.1} parent=39 // pred_check_branch
          %327 = sbr.rel (%p325) target = $region52
        $region51: #{tpu_custom_call.1} parent=39 // pred_region
          %328 = dma.done %s321, 256
        $region52: #{tpu_custom_call.1} parent=39 // pred_fallthru
          _
        // Predicated region
        $region53: #{tpu_custom_call.1} parent=39 // pred_check
          %p329 = pneg %p145
        $region54: #{tpu_custom_call.1} parent=39 // pred_check_branch
          %331 = sbr.rel (%p329) target = $region56
        $region55: #{tpu_custom_call.1} parent=39 // pred_region
          %332 = dma.done [#allocation11], 512
        $region56: #{tpu_custom_call.1} parent=39 // pred_fallthru
          _
        %s333 = sand.u32 %s55, 1
        %s334 = scalar_lea.sflag [#allocation5], %s333
        %s335 = sand.u32 %s55, 1
        %s336 = smul.addr %s335, 8
        %s337 = scalar_lea.vmem [#allocation4], %s336
        %p338 = pneg %p68
        %p339 = pneg %p65
        %s340 = sand.u32 %s26, 1
        %s341 = scalar_lea.sflag [#allocation8], %s340
        %s342 = sand.u32 %s83, 1
        %s343 = smul.addr %s342, 16
        %s344 = scalar_lea.vmem [#allocation7], %s343
        %p345 = pneg %p96
        %p346 = pneg %p93
        %s347 = sand.u32 %s26, 1
        %s348 = scalar_lea.sflag [#allocation8], %s347
        %s349 = sand.u32 %s111, 1
        %s350 = smul.addr %s349, 16
        %s351 = scalar_lea.vmem [#allocation9], %s350
        %p352 = pneg %p124
        %p353 = pneg %p121
        %p354 = pneg %p145
        %p355 = pneg %p142
        %p356 = pneg %p166
        %p357 = pneg %p163
        %p358 = pneg %p194
        %p359 = pneg %p191
        %s360 = sand.u32 %s181, 1
        %s361 = scalar_lea.sflag [#allocation6], %s360
        %s362 = sand.u32 %s181, 1
        %s363 = smul.addr %s362, 8
        %s364 = scalar_lea.vmem [#allocation12], %s363
        %s365 = smul.u32 2, %s33
        %s366 = smul.u32 2, %s33
        %p367 = scmp.eq.s32.totalorder %s33, 0
        // Predicated region
        $region57: #{tpu_custom_call.1} parent=39 // pred_check
          %p368 = pneg %p367
        $region58: #{tpu_custom_call.1} parent=39 // pred_check_branch
          %370 = sbr.rel (%p368) target = $region60
        $region59: #{tpu_custom_call.1} parent=39 // pred_region
          %vm371 = vcmask 261120
          %372 = vst.msk [vmem:[#allocation3] sm:$0xff] %vm371, 0.0
        $region60: #{tpu_custom_call.1} parent=39 // pred_fallthru
          _
        %v373 = vld [vmem:[%s306] sm:$0xff]
        %v374 = vld [vmem:[%s315] sm:$0xff]
        %v375 = vld [vmem:[%s315 + $0x8] sm:$0xff]
        %vm376 = vcmask 64512
        %v378 = vsel %vm376, %v373, 0
        %v381 = vsel %vm376, %v374, 0
        %v384 = vsel %vm376, %v375, 0
        %386 = vmatprep.subr.mxu0 0.0
        %387 = vmatpush1.xpose.msra.mxu0 %v381
        %388 = vmatprep.subr.mxu0 0.0
        %389 = vmatpush1.xpose.msra.mxu0 %v384
        %390 = vmatprep.subr.mxu0 0.0
        %391 = vmatpush1.xpose.msra.mxu0 0.0
        %392 = vmatprep.subr.mxu0 0.0
        %393 = vmatpush1.xpose.msra.mxu0 0.0
        %394 = vmatprep.subr.mxu0 0.0
        %395 = vmatpush1.xpose.msra.mxu0 0.0
        %396 = vmatprep.subr.mxu0 0.0
        %397 = vmatpush1.xpose.msra.mxu0 0.0
        %398 = vmatprep.subr.mxu0 0.0
        %399 = vmatpush1.xpose.msra.mxu0 0.0
        %400 = vmatprep.subr.mxu0 0.0
        %401 = vmatpush1.xpose.msra.mxu0 0.0
        %402 = vmatprep.subr.mxu0 0.0
        %403 = vmatpush1.xpose.msra.mxu0 0.0
        %404 = vmatprep.subr.mxu0 0.0
        %405 = vmatpush1.xpose.msra.mxu0 0.0
        %406 = vmatprep.subr.mxu0 0.0
        %407 = vmatpush1.xpose.msra.mxu0 0.0
        %408 = vmatprep.subr.mxu0 0.0
        %409 = vmatpush1.xpose.msra.mxu0 0.0
        %410 = vmatprep.subr.mxu0 0.0
        %411 = vmatpush1.xpose.msra.mxu0 0.0
        %412 = vmatprep.subr.mxu0 0.0
        %413 = vmatpush1.xpose.msra.mxu0 0.0
        %414 = vmatprep.subr.mxu0 0.0
        %415 = vmatpush1.xpose.msra.mxu0 0.0
        %416 = vmatprep.subr.mxu0 0.0
        %417 = vmatpush1.xpose.msra.mxu0 0.0
        %418 = vmatprep.subr.mxu0 0.0
        %419 = vmatpush1.xpose.msra.mxu0 0.0
        %420 = vmatprep.subr.mxu0 0.0
        %421 = vmatpush1.xpose.msra.mxu0 0.0
        %422 = vmatprep.subr.mxu0 0.0
        %423 = vmatpush1.xpose.msra.mxu0 0.0
        %424 = vmatprep.subr.mxu0 0.0
        %425 = vmatpush1.xpose.msra.mxu0 0.0
        %426 = vmatprep.subr.mxu0 0.0
        %427 = vmatpush1.xpose.msra.mxu0 0.0
        %428 = vmatprep.subr.mxu0 0.0
        %429 = vmatpush1.xpose.msra.mxu0 0.0
        %430 = vmatprep.subr.mxu0 0.0
        %431 = vmatpush1.xpose.msra.mxu0 0.0
        %432 = vmatprep.subr.mxu0 0.0
        %433 = vmatpush1.xpose.msra.mxu0 0.0
        %434 = vmatprep.subr.mxu0 0.0
        %435 = vmatpush1.xpose.msra.mxu0 0.0
        %436 = vmatprep.subr.mxu0 0.0
        %437 = vmatpush1.xpose.msra.mxu0 0.0
        %438 = vmatprep.subr.mxu0 0.0
        %439 = vmatpush1.xpose.msra.mxu0 0.0
        %440 = vmatprep.subr.mxu0 0.0
        %441 = vmatpush1.xpose.msra.mxu0 0.0
        %442 = vmatprep.subr.mxu0 0.0
        %443 = vmatpush1.xpose.msra.mxu0 0.0
        %444 = vmatprep.subr.mxu0 0.0
        %445 = vmatpush1.xpose.msra.mxu0 0.0
        %446 = vmatprep.subr.mxu0 0.0
        %447 = vmatpush1.xpose.msra.mxu0 0.0
        %448 = vmatprep.subr.mxu0 0.0
        %449 = vmatpush1.xpose.msra.mxu0 0.0
        %450 = vmatprep.mubr.f32.mxu0 0.0
        %451 = vmatmul.mubr.f32.gmra.mrb[0].mxu0 %v378
        %v452 = vpop.f32.mrb[0].mxu0
        %v453 = vadd.f32 0.0, %v452
        %v454 = vpop.f32.mrb[0].mxu0
        %455 = vdwg.mxu0
        %vm456 = vcmask 130048
        %457 = vst.msk [vmem:[#allocation2] sm:$0xff] %vm456, %v453
        %v458 = vld [vmem:[%s306] sm:$0xff]
        %v459 = vld [vmem:[%s315] sm:$0xff]
        %v460 = vld [vmem:[%s315 + $0x8] sm:$0xff]
        %462 = vrot.lane.b32.xlu0 %v458, 120
        %v463 = vpop.permute.xlu0 %462
        %466 = vrot.lane.b32.xlu0 %v459, 120
        %v467 = vpop.permute.xlu0 %466
        %468 = vrot.lane.b32.xlu0 %v460, 120
        %v469 = vpop.permute.xlu0 %468
        %v470 = vsel %vm376, %v463, 0
        %v472 = vsel %vm376, %v467, 0
        %v474 = vsel %vm376, %v469, 0
        %476 = vmatprep.subr.mxu0 0.0
        %477 = vmatpush1.xpose.msra.mxu0 %v472
        %478 = vmatprep.subr.mxu0 0.0
        %479 = vmatpush1.xpose.msra.mxu0 %v474
        %480 = vmatprep.subr.mxu0 0.0
        %481 = vmatpush1.xpose.msra.mxu0 0.0
        %482 = vmatprep.subr.mxu0 0.0
        %483 = vmatpush1.xpose.msra.mxu0 0.0
        %484 = vmatprep.subr.mxu0 0.0
        %485 = vmatpush1.xpose.msra.mxu0 0.0
        %486 = vmatprep.subr.mxu0 0.0
        %487 = vmatpush1.xpose.msra.mxu0 0.0
        %488 = vmatprep.subr.mxu0 0.0
        %489 = vmatpush1.xpose.msra.mxu0 0.0
        %490 = vmatprep.subr.mxu0 0.0
        %491 = vmatpush1.xpose.msra.mxu0 0.0
        %492 = vmatprep.subr.mxu0 0.0
        %493 = vmatpush1.xpose.msra.mxu0 0.0
        %494 = vmatprep.subr.mxu0 0.0
        %495 = vmatpush1.xpose.msra.mxu0 0.0
        %496 = vmatprep.subr.mxu0 0.0
        %497 = vmatpush1.xpose.msra.mxu0 0.0
        %498 = vmatprep.subr.mxu0 0.0
        %499 = vmatpush1.xpose.msra.mxu0 0.0
        %500 = vmatprep.subr.mxu0 0.0
        %501 = vmatpush1.xpose.msra.mxu0 0.0
        %502 = vmatprep.subr.mxu0 0.0
        %503 = vmatpush1.xpose.msra.mxu0 0.0
        %504 = vmatprep.subr.mxu0 0.0
        %505 = vmatpush1.xpose.msra.mxu0 0.0
        %506 = vmatprep.subr.mxu0 0.0
        %507 = vmatpush1.xpose.msra.mxu0 0.0
        %508 = vmatprep.subr.mxu0 0.0
        %509 = vmatpush1.xpose.msra.mxu0 0.0
        %510 = vmatprep.subr.mxu0 0.0
        %511 = vmatpush1.xpose.msra.mxu0 0.0
        %512 = vmatprep.subr.mxu0 0.0
        %513 = vmatpush1.xpose.msra.mxu0 0.0
        %514 = vmatprep.subr.mxu0 0.0
        %515 = vmatpush1.xpose.msra.mxu0 0.0
        %516 = vmatprep.subr.mxu0 0.0
        %517 = vmatpush1.xpose.msra.mxu0 0.0
        %518 = vmatprep.subr.mxu0 0.0
        %519 = vmatpush1.xpose.msra.mxu0 0.0
        %520 = vmatprep.subr.mxu0 0.0
        %521 = vmatpush1.xpose.msra.mxu0 0.0
        %522 = vmatprep.subr.mxu0 0.0
        %523 = vmatpush1.xpose.msra.mxu0 0.0
        %524 = vmatprep.subr.mxu0 0.0
        %525 = vmatpush1.xpose.msra.mxu0 0.0
        %526 = vmatprep.subr.mxu0 0.0
        %527 = vmatpush1.xpose.msra.mxu0 0.0
        %528 = vmatprep.subr.mxu0 0.0
        %529 = vmatpush1.xpose.msra.mxu0 0.0
        %530 = vmatprep.subr.mxu0 0.0
        %531 = vmatpush1.xpose.msra.mxu0 0.0
        %532 = vmatprep.subr.mxu0 0.0
        %533 = vmatpush1.xpose.msra.mxu0 0.0
        %534 = vmatprep.subr.mxu0 0.0
        %535 = vmatpush1.xpose.msra.mxu0 0.0
        %536 = vmatprep.subr.mxu0 0.0
        %537 = vmatpush1.xpose.msra.mxu0 0.0
        %538 = vmatprep.subr.mxu0 0.0
        %539 = vmatpush1.xpose.msra.mxu0 0.0
        %540 = vmatprep.mubr.f32.mxu0 0.0
        %541 = vmatmul.mubr.f32.gmra.mrb[0].mxu0 %v470
        %v542 = vpop.f32.mrb[0].mxu0
        %v543 = vadd.f32 0.0, %v542
        %v544 = vpop.f32.mrb[0].mxu0
        %545 = vdwg.mxu0
        %s546 = scalar_lea.vmem [#allocation2], 8
        %547 = vst.msk [vmem:[%s546] sm:$0xff] %vm456, %v543
        %v548 = vld [vmem:[%s306] sm:$0xff]
        %v549 = vld [vmem:[%s315] sm:$0xff]
        %v550 = vld [vmem:[%s315 + $0x8] sm:$0xff]
        %552 = vrot.lane.b32.xlu0 %v548, 112
        %v553 = vpop.permute.xlu0 %552
        %556 = vrot.lane.b32.xlu0 %v549, 112
        %v557 = vpop.permute.xlu0 %556
        %558 = vrot.lane.b32.xlu0 %v550, 112
        %v559 = vpop.permute.xlu0 %558
        %v560 = vsel %vm376, %v553, 0
        %v562 = vsel %vm376, %v557, 0
        %v564 = vsel %vm376, %v559, 0
        %566 = vmatprep.subr.mxu0 0.0
        %567 = vmatpush1.xpose.msra.mxu0 %v562
        %568 = vmatprep.subr.mxu0 0.0
        %569 = vmatpush1.xpose.msra.mxu0 %v564
        %570 = vmatprep.subr.mxu0 0.0
        %571 = vmatpush1.xpose.msra.mxu0 0.0
        %572 = vmatprep.subr.mxu0 0.0
        %573 = vmatpush1.xpose.msra.mxu0 0.0
        %574 = vmatprep.subr.mxu0 0.0
        %575 = vmatpush1.xpose.msra.mxu0 0.0
        %576 = vmatprep.subr.mxu0 0.0
        %577 = vmatpush1.xpose.msra.mxu0 0.0
        %578 = vmatprep.subr.mxu0 0.0
        %579 = vmatpush1.xpose.msra.mxu0 0.0
        %580 = vmatprep.subr.mxu0 0.0
        %581 = vmatpush1.xpose.msra.mxu0 0.0
        %582 = vmatprep.subr.mxu0 0.0
        %583 = vmatpush1.xpose.msra.mxu0 0.0
        %584 = vmatprep.subr.mxu0 0.0
        %585 = vmatpush1.xpose.msra.mxu0 0.0
        %586 = vmatprep.subr.mxu0 0.0
        %587 = vmatpush1.xpose.msra.mxu0 0.0
        %588 = vmatprep.subr.mxu0 0.0
        %589 = vmatpush1.xpose.msra.mxu0 0.0
        %590 = vmatprep.subr.mxu0 0.0
        %591 = vmatpush1.xpose.msra.mxu0 0.0
        %592 = vmatprep.subr.mxu0 0.0
        %593 = vmatpush1.xpose.msra.mxu0 0.0
        %594 = vmatprep.subr.mxu0 0.0
        %595 = vmatpush1.xpose.msra.mxu0 0.0
        %596 = vmatprep.subr.mxu0 0.0
        %597 = vmatpush1.xpose.msra.mxu0 0.0
        %598 = vmatprep.subr.mxu0 0.0
        %599 = vmatpush1.xpose.msra.mxu0 0.0
        %600 = vmatprep.subr.mxu0 0.0
        %601 = vmatpush1.xpose.msra.mxu0 0.0
        %602 = vmatprep.subr.mxu0 0.0
        %603 = vmatpush1.xpose.msra.mxu0 0.0
        %604 = vmatprep.subr.mxu0 0.0
        %605 = vmatpush1.xpose.msra.mxu0 0.0
        %606 = vmatprep.subr.mxu0 0.0
        %607 = vmatpush1.xpose.msra.mxu0 0.0
        %608 = vmatprep.subr.mxu0 0.0
        %609 = vmatpush1.xpose.msra.mxu0 0.0
        %610 = vmatprep.subr.mxu0 0.0
        %611 = vmatpush1.xpose.msra.mxu0 0.0
        %612 = vmatprep.subr.mxu0 0.0
        %613 = vmatpush1.xpose.msra.mxu0 0.0
        %614 = vmatprep.subr.mxu0 0.0
        %615 = vmatpush1.xpose.msra.mxu0 0.0
        %616 = vmatprep.subr.mxu0 0.0
        %617 = vmatpush1.xpose.msra.mxu0 0.0
        %618 = vmatprep.subr.mxu0 0.0
        %619 = vmatpush1.xpose.msra.mxu0 0.0
        %620 = vmatprep.subr.mxu0 0.0
        %621 = vmatpush1.xpose.msra.mxu0 0.0
        %622 = vmatprep.subr.mxu0 0.0
        %623 = vmatpush1.xpose.msra.mxu0 0.0
        %624 = vmatprep.subr.mxu0 0.0
        %625 = vmatpush1.xpose.msra.mxu0 0.0
        %626 = vmatprep.subr.mxu0 0.0
        %627 = vmatpush1.xpose.msra.mxu0 0.0
        %628 = vmatprep.subr.mxu0 0.0
        %629 = vmatpush1.xpose.msra.mxu0 0.0
        %630 = vmatprep.mubr.f32.mxu0 0.0
        %631 = vmatmul.mubr.f32.gmra.mrb[0].mxu0 %v560
        %v632 = vpop.f32.mrb[0].mxu0
        %v633 = vadd.f32 0.0, %v632
        %v634 = vpop.f32.mrb[0].mxu0
        %635 = vdwg.mxu0
        %s636 = scalar_lea.vmem [#allocation2], 16
        %637 = vst.msk [vmem:[%s636] sm:$0xff] %vm456, %v633
        %v638 = vld [vmem:[%s306] sm:$0xff]
        %v639 = vld [vmem:[%s315] sm:$0xff]
        %v640 = vld [vmem:[%s315 + $0x8] sm:$0xff]
        %642 = vrot.lane.b32.xlu0 %v638, 104
        %v643 = vpop.permute.xlu0 %642
        %646 = vrot.lane.b32.xlu0 %v639, 104
        %v647 = vpop.permute.xlu0 %646
        %648 = vrot.lane.b32.xlu0 %v640, 104
        %v649 = vpop.permute.xlu0 %648
        %v650 = vsel %vm376, %v643, 0
        %v652 = vsel %vm376, %v647, 0
        %v654 = vsel %vm376, %v649, 0
        %656 = vmatprep.subr.mxu0 0.0
        %657 = vmatpush1.xpose.msra.mxu0 %v652
        %658 = vmatprep.subr.mxu0 0.0
        %659 = vmatpush1.xpose.msra.mxu0 %v654
        %660 = vmatprep.subr.mxu0 0.0
        %661 = vmatpush1.xpose.msra.mxu0 0.0
        %662 = vmatprep.subr.mxu0 0.0
        %663 = vmatpush1.xpose.msra.mxu0 0.0
        %664 = vmatprep.subr.mxu0 0.0
        %665 = vmatpush1.xpose.msra.mxu0 0.0
        %666 = vmatprep.subr.mxu0 0.0
        %667 = vmatpush1.xpose.msra.mxu0 0.0
        %668 = vmatprep.subr.mxu0 0.0
        %669 = vmatpush1.xpose.msra.mxu0 0.0
        %670 = vmatprep.subr.mxu0 0.0
        %671 = vmatpush1.xpose.msra.mxu0 0.0
        %672 = vmatprep.subr.mxu0 0.0
        %673 = vmatpush1.xpose.msra.mxu0 0.0
        %674 = vmatprep.subr.mxu0 0.0
        %675 = vmatpush1.xpose.msra.mxu0 0.0
        %676 = vmatprep.subr.mxu0 0.0
        %677 = vmatpush1.xpose.msra.mxu0 0.0
        %678 = vmatprep.subr.mxu0 0.0
        %679 = vmatpush1.xpose.msra.mxu0 0.0
        %680 = vmatprep.subr.mxu0 0.0
        %681 = vmatpush1.xpose.msra.mxu0 0.0
        %682 = vmatprep.subr.mxu0 0.0
        %683 = vmatpush1.xpose.msra.mxu0 0.0
        %684 = vmatprep.subr.mxu0 0.0
        %685 = vmatpush1.xpose.msra.mxu0 0.0
        %686 = vmatprep.subr.mxu0 0.0
        %687 = vmatpush1.xpose.msra.mxu0 0.0
        %688 = vmatprep.subr.mxu0 0.0
        %689 = vmatpush1.xpose.msra.mxu0 0.0
        %690 = vmatprep.subr.mxu0 0.0
        %691 = vmatpush1.xpose.msra.mxu0 0.0
        %692 = vmatprep.subr.mxu0 0.0
        %693 = vmatpush1.xpose.msra.mxu0 0.0
        %694 = vmatprep.subr.mxu0 0.0
        %695 = vmatpush1.xpose.msra.mxu0 0.0
        %696 = vmatprep.subr.mxu0 0.0
        %697 = vmatpush1.xpose.msra.mxu0 0.0
        %698 = vmatprep.subr.mxu0 0.0
        %699 = vmatpush1.xpose.msra.mxu0 0.0
        %700 = vmatprep.subr.mxu0 0.0
        %701 = vmatpush1.xpose.msra.mxu0 0.0
        %702 = vmatprep.subr.mxu0 0.0
        %703 = vmatpush1.xpose.msra.mxu0 0.0
        %704 = vmatprep.subr.mxu0 0.0
        %705 = vmatpush1.xpose.msra.mxu0 0.0
        %706 = vmatprep.subr.mxu0 0.0
        %707 = vmatpush1.xpose.msra.mxu0 0.0
        %708 = vmatprep.subr.mxu0 0.0
        %709 = vmatpush1.xpose.msra.mxu0 0.0
        %710 = vmatprep.subr.mxu0 0.0
        %711 = vmatpush1.xpose.msra.mxu0 0.0
        %712 = vmatprep.subr.mxu0 0.0
        %713 = vmatpush1.xpose.msra.mxu0 0.0
        %714 = vmatprep.subr.mxu0 0.0
        %715 = vmatpush1.xpose.msra.mxu0 0.0
        %716 = vmatprep.subr.mxu0 0.0
        %717 = vmatpush1.xpose.msra.mxu0 0.0
        %718 = vmatprep.subr.mxu0 0.0
        %719 = vmatpush1.xpose.msra.mxu0 0.0
        %720 = vmatprep.mubr.f32.mxu0 0.0
        %721 = vmatmul.mubr.f32.gmra.mrb[0].mxu0 %v650
        %v722 = vpop.f32.mrb[0].mxu0
        %v723 = vadd.f32 0.0, %v722
        %v724 = vpop.f32.mrb[0].mxu0
        %725 = vdwg.mxu0
        %s726 = scalar_lea.vmem [#allocation2], 24
        %727 = vst.msk [vmem:[%s726] sm:$0xff] %vm456, %v723
        %v728 = vld [vmem:[#allocation2] sm:$0xff]
        %v729 = vld [vmem:[#allocation2 + $0x8] sm:$0xff]
        %v730 = vld [vmem:[#allocation2 + $0x10] sm:$0xff]
        %v731 = vld [vmem:[#allocation2 + $0x18] sm:$0xff]
        %v732 = vsel %vm456, %v728, -inf
        %v733 = vsel %vm456, %v729, -inf
        %v734 = vsel %vm456, %v730, -inf
        %v735 = vsel %vm456, %v731, -inf
        %v736 = vmax.f32 %v732, %v733
        %v737 = vmax.f32 %v734, %v735
        %v738 = vmax.f32 %v736, %v737
        %v739 = vsub.f32 %v728, %v738
        %v740 = vsub.f32 %v729, %v738
        %v741 = vsub.f32 %v730, %v738
        %v742 = vsub.f32 %v731, %v738
        %v743 = vmul.f32 %v739, 0.35355338
        %v744 = vmul.f32 %v740, 0.35355338
        %v745 = vmul.f32 %v741, 0.35355338
        %v746 = vmul.f32 %v742, 0.35355338
        %v747 = vmul.f32 %v743, 1.442695
        %v748 = vpow.pop %v747
        %v749 = vmul.f32 %v744, 1.442695
        %v750 = vpow.pop %v749
        %v751 = vmul.f32 %v745, 1.442695
        %v752 = vpow.pop %v751
        %v753 = vmul.f32 %v746, 1.442695
        %v754 = vpow.pop %v753
        %755 = vst.msk [vmem:[#allocation2] sm:$0xff] %vm456, %v748
        %756 = vst.msk [vmem:[#allocation2 + $0x8] sm:$0xff] %vm456, %v750
        %757 = vst.msk [vmem:[#allocation2 + $0x10] sm:$0xff] %vm456, %v752
        %758 = vst.msk [vmem:[#allocation2 + $0x18] sm:$0xff] %vm456, %v754
        %v759 = vsel %vm456, %v748, 0.0
        %v760 = vsel %vm456, %v750, 0.0
        %v761 = vadd.f32 %v759, %v760
        %v762 = vsel %vm456, %v752, 0.0
        %v763 = vadd.f32 %v761, %v762
        %v764 = vsel %vm456, %v754, 0.0
        %v765 = vadd.f32 %v763, %v764
        %v766 = vrcp.pop %v765
        %v767 = vld [vmem:[#allocation2] sm:$0xff]
        %v768 = vmul.f32 %v767, %v766
        %v769 = vld [vmem:[%s324] sm:$0xff]
        %v770 = vld [vmem:[%s324 + $0x8] sm:$0xff]
        %v771 = vld [vmem:[#allocation3] sm:$0xff]
        %v773 = vsel %vm456, %v768, 0
        %775 = vmatprep.subr.mxu0 0.0
        %776 = vmatpush1.msra.mxu0 %v769
        %777 = vmatprep.subr.mxu0 0.0
        %778 = vmatpush1.msra.mxu0 %v770
        %779 = vmatprep.subr.mxu0 0.0
        %780 = vmatpush1.msra.mxu0 0.0
        %781 = vmatprep.subr.mxu0 0.0
        %782 = vmatpush1.msra.mxu0 0.0
        %783 = vmatprep.subr.mxu0 0.0
        %784 = vmatpush1.msra.mxu0 0.0
        %785 = vmatprep.subr.mxu0 0.0
        %786 = vmatpush1.msra.mxu0 0.0
        %787 = vmatprep.subr.mxu0 0.0
        %788 = vmatpush1.msra.mxu0 0.0
        %789 = vmatprep.subr.mxu0 0.0
        %790 = vmatpush1.msra.mxu0 0.0
        %791 = vmatprep.subr.mxu0 0.0
        %792 = vmatpush1.msra.mxu0 0.0
        %793 = vmatprep.subr.mxu0 0.0
        %794 = vmatpush1.msra.mxu0 0.0
        %795 = vmatprep.subr.mxu0 0.0
        %796 = vmatpush1.msra.mxu0 0.0
        %797 = vmatprep.subr.mxu0 0.0
        %798 = vmatpush1.msra.mxu0 0.0
        %799 = vmatprep.subr.mxu0 0.0
        %800 = vmatpush1.msra.mxu0 0.0
        %801 = vmatprep.subr.mxu0 0.0
        %802 = vmatpush1.msra.mxu0 0.0
        %803 = vmatprep.subr.mxu0 0.0
        %804 = vmatpush1.msra.mxu0 0.0
        %805 = vmatprep.subr.mxu0 0.0
        %806 = vmatpush1.msra.mxu0 0.0
        %807 = vmatprep.subr.mxu0 0.0
        %808 = vmatpush1.msra.mxu0 0.0
        %809 = vmatprep.subr.mxu0 0.0
        %810 = vmatpush1.msra.mxu0 0.0
        %811 = vmatprep.subr.mxu0 0.0
        %812 = vmatpush1.msra.mxu0 0.0
        %813 = vmatprep.subr.mxu0 0.0
        %814 = vmatpush1.msra.mxu0 0.0
        %815 = vmatprep.subr.mxu0 0.0
        %816 = vmatpush1.msra.mxu0 0.0
        %817 = vmatprep.subr.mxu0 0.0
        %818 = vmatpush1.msra.mxu0 0.0
        %819 = vmatprep.subr.mxu0 0.0
        %820 = vmatpush1.msra.mxu0 0.0
        %821 = vmatprep.subr.mxu0 0.0
        %822 = vmatpush1.msra.mxu0 0.0
        %823 = vmatprep.subr.mxu0 0.0
        %824 = vmatpush1.msra.mxu0 0.0
        %825 = vmatprep.subr.mxu0 0.0
        %826 = vmatpush1.msra.mxu0 0.0
        %827 = vmatprep.subr.mxu0 0.0
        %828 = vmatpush1.msra.mxu0 0.0
        %829 = vmatprep.subr.mxu0 0.0
        %830 = vmatpush1.msra.mxu0 0.0
        %831 = vmatprep.subr.mxu0 0.0
        %832 = vmatpush1.msra.mxu0 0.0
        %833 = vmatprep.subr.mxu0 0.0
        %834 = vmatpush1.msra.mxu0 0.0
        %835 = vmatprep.subr.mxu0 0.0
        %836 = vmatpush1.msra.mxu0 0.0
        %837 = vmatprep.subr.mxu0 0.0
        %838 = vmatpush1.msra.mxu0 0.0
        %839 = vmatprep.mubr.f32.mxu0 0.0
        %840 = vmatmul.mubr.f32.gmra.mrb[0].mxu0 %v773
        %v841 = vpop.f32.mrb[0].mxu0
        %v842 = vadd.f32 0.0, %v841
        %v843 = vpop.f32.mrb[0].mxu0
        %844 = vdwg.mxu0
        %v845 = vadd.f32 %v771, %v842
        %846 = vst.msk [vmem:[#allocation3] sm:$0xff] %vm376, %v845
        %v847 = vld [vmem:[%s546] sm:$0xff]
        %v848 = vmul.f32 %v847, %v766
        %v849 = vld [vmem:[%s324] sm:$0xff]
        %v850 = vld [vmem:[%s324 + $0x8] sm:$0xff]
        %v851 = vld [vmem:[#allocation3] sm:$0xff]
        %854 = vrot.lane.b32.xlu0 %v849, 120
        %v855 = vpop.permute.xlu0 %854
        %856 = vrot.lane.b32.xlu0 %v850, 120
        %v857 = vpop.permute.xlu0 %856
        %v861 = vsel %vm456, %v848, 0
        %863 = vmatprep.subr.mxu0 0.0
        %864 = vmatpush1.msra.mxu0 %v855
        %865 = vmatprep.subr.mxu0 0.0
        %866 = vmatpush1.msra.mxu0 %v857
        %867 = vmatprep.subr.mxu0 0.0
        %868 = vmatpush1.msra.mxu0 0.0
        %869 = vmatprep.subr.mxu0 0.0
        %870 = vmatpush1.msra.mxu0 0.0
        %871 = vmatprep.subr.mxu0 0.0
        %872 = vmatpush1.msra.mxu0 0.0
        %873 = vmatprep.subr.mxu0 0.0
        %874 = vmatpush1.msra.mxu0 0.0
        %875 = vmatprep.subr.mxu0 0.0
        %876 = vmatpush1.msra.mxu0 0.0
        %877 = vmatprep.subr.mxu0 0.0
        %878 = vmatpush1.msra.mxu0 0.0
        %879 = vmatprep.subr.mxu0 0.0
        %880 = vmatpush1.msra.mxu0 0.0
        %881 = vmatprep.subr.mxu0 0.0
        %882 = vmatpush1.msra.mxu0 0.0
        %883 = vmatprep.subr.mxu0 0.0
        %884 = vmatpush1.msra.mxu0 0.0
        %885 = vmatprep.subr.mxu0 0.0
        %886 = vmatpush1.msra.mxu0 0.0
        %887 = vmatprep.subr.mxu0 0.0
        %888 = vmatpush1.msra.mxu0 0.0
        %889 = vmatprep.subr.mxu0 0.0
        %890 = vmatpush1.msra.mxu0 0.0
        %891 = vmatprep.subr.mxu0 0.0
        %892 = vmatpush1.msra.mxu0 0.0
        %893 = vmatprep.subr.mxu0 0.0
        %894 = vmatpush1.msra.mxu0 0.0
        %895 = vmatprep.subr.mxu0 0.0
        %896 = vmatpush1.msra.mxu0 0.0
        %897 = vmatprep.subr.mxu0 0.0
        %898 = vmatpush1.msra.mxu0 0.0
        %899 = vmatprep.subr.mxu0 0.0
        %900 = vmatpush1.msra.mxu0 0.0
        %901 = vmatprep.subr.mxu0 0.0
        %902 = vmatpush1.msra.mxu0 0.0
        %903 = vmatprep.subr.mxu0 0.0
        %904 = vmatpush1.msra.mxu0 0.0
        %905 = vmatprep.subr.mxu0 0.0
        %906 = vmatpush1.msra.mxu0 0.0
        %907 = vmatprep.subr.mxu0 0.0
        %908 = vmatpush1.msra.mxu0 0.0
        %909 = vmatprep.subr.mxu0 0.0
        %910 = vmatpush1.msra.mxu0 0.0
        %911 = vmatprep.subr.mxu0 0.0
        %912 = vmatpush1.msra.mxu0 0.0
        %913 = vmatprep.subr.mxu0 0.0
        %914 = vmatpush1.msra.mxu0 0.0
        %915 = vmatprep.subr.mxu0 0.0
        %916 = vmatpush1.msra.mxu0 0.0
        %917 = vmatprep.subr.mxu0 0.0
        %918 = vmatpush1.msra.mxu0 0.0
        %919 = vmatprep.subr.mxu0 0.0
        %920 = vmatpush1.msra.mxu0 0.0
        %921 = vmatprep.subr.mxu0 0.0
        %922 = vmatpush1.msra.mxu0 0.0
        %923 = vmatprep.subr.mxu0 0.0
        %924 = vmatpush1.msra.mxu0 0.0
        %925 = vmatprep.subr.mxu0 0.0
        %926 = vmatpush1.msra.mxu0 0.0
        %927 = vmatprep.mubr.f32.mxu0 0.0
        %928 = vmatmul.mubr.f32.gmra.mrb[0].mxu0 %v861
        %v929 = vpop.f32.mrb[0].mxu0
        %v930 = vadd.f32 0.0, %v929
        %v931 = vpop.f32.mrb[0].mxu0
        %932 = vdwg.mxu0
        %934 = vrot.lane.b32.xlu0 %v930, 8
        %v935 = vpop.permute.xlu0 %934
        %v937 = vadd.f32 %v851, %v935
        %vm938 = vcmask 130112
        %939 = vst.msk [vmem:[#allocation3] sm:$0xff] %vm938, %v937
        %v940 = vld [vmem:[%s636] sm:$0xff]
        %v941 = vmul.f32 %v940, %v766
        %v942 = vld [vmem:[%s324] sm:$0xff]
        %v943 = vld [vmem:[%s324 + $0x8] sm:$0xff]
        %v944 = vld [vmem:[#allocation3] sm:$0xff]
        %947 = vrot.lane.b32.xlu0 %v942, 112
        %v948 = vpop.permute.xlu0 %947
        %949 = vrot.lane.b32.xlu0 %v943, 112
        %v950 = vpop.permute.xlu0 %949
        %v954 = vsel %vm456, %v941, 0
        %956 = vmatprep.subr.mxu0 0.0
        %957 = vmatpush1.msra.mxu0 %v948
        %958 = vmatprep.subr.mxu0 0.0
        %959 = vmatpush1.msra.mxu0 %v950
        %960 = vmatprep.subr.mxu0 0.0
        %961 = vmatpush1.msra.mxu0 0.0
        %962 = vmatprep.subr.mxu0 0.0
        %963 = vmatpush1.msra.mxu0 0.0
        %964 = vmatprep.subr.mxu0 0.0
        %965 = vmatpush1.msra.mxu0 0.0
        %966 = vmatprep.subr.mxu0 0.0
        %967 = vmatpush1.msra.mxu0 0.0
        %968 = vmatprep.subr.mxu0 0.0
        %969 = vmatpush1.msra.mxu0 0.0
        %970 = vmatprep.subr.mxu0 0.0
        %971 = vmatpush1.msra.mxu0 0.0
        %972 = vmatprep.subr.mxu0 0.0
        %973 = vmatpush1.msra.mxu0 0.0
        %974 = vmatprep.subr.mxu0 0.0
        %975 = vmatpush1.msra.mxu0 0.0
        %976 = vmatprep.subr.mxu0 0.0
        %977 = vmatpush1.msra.mxu0 0.0
        %978 = vmatprep.subr.mxu0 0.0
        %979 = vmatpush1.msra.mxu0 0.0
        %980 = vmatprep.subr.mxu0 0.0
        %981 = vmatpush1.msra.mxu0 0.0
        %982 = vmatprep.subr.mxu0 0.0
        %983 = vmatpush1.msra.mxu0 0.0
        %984 = vmatprep.subr.mxu0 0.0
        %985 = vmatpush1.msra.mxu0 0.0
        %986 = vmatprep.subr.mxu0 0.0
        %987 = vmatpush1.msra.mxu0 0.0
        %988 = vmatprep.subr.mxu0 0.0
        %989 = vmatpush1.msra.mxu0 0.0
        %990 = vmatprep.subr.mxu0 0.0
        %991 = vmatpush1.msra.mxu0 0.0
        %992 = vmatprep.subr.mxu0 0.0
        %993 = vmatpush1.msra.mxu0 0.0
        %994 = vmatprep.subr.mxu0 0.0
        %995 = vmatpush1.msra.mxu0 0.0
        %996 = vmatprep.subr.mxu0 0.0
        %997 = vmatpush1.msra.mxu0 0.0
        %998 = vmatprep.subr.mxu0 0.0
        %999 = vmatpush1.msra.mxu0 0.0
        %1000 = vmatprep.subr.mxu0 0.0
        %1001 = vmatpush1.msra.mxu0 0.0
        %1002 = vmatprep.subr.mxu0 0.0
        %1003 = vmatpush1.msra.mxu0 0.0
        %1004 = vmatprep.subr.mxu0 0.0
        %1005 = vmatpush1.msra.mxu0 0.0
        %1006 = vmatprep.subr.mxu0 0.0
        %1007 = vmatpush1.msra.mxu0 0.0
        %1008 = vmatprep.subr.mxu0 0.0
        %1009 = vmatpush1.msra.mxu0 0.0
        %1010 = vmatprep.subr.mxu0 0.0
        %1011 = vmatpush1.msra.mxu0 0.0
        %1012 = vmatprep.subr.mxu0 0.0
        %1013 = vmatpush1.msra.mxu0 0.0
        %1014 = vmatprep.subr.mxu0 0.0
        %1015 = vmatpush1.msra.mxu0 0.0
        %1016 = vmatprep.subr.mxu0 0.0
        %1017 = vmatpush1.msra.mxu0 0.0
        %1018 = vmatprep.subr.mxu0 0.0
        %1019 = vmatpush1.msra.mxu0 0.0
        %1020 = vmatprep.mubr.f32.mxu0 0.0
        %1021 = vmatmul.mubr.f32.gmra.mrb[0].mxu0 %v954
        %v1022 = vpop.f32.mrb[0].mxu0
        %v1023 = vadd.f32 0.0, %v1022
        %v1024 = vpop.f32.mrb[0].mxu0
        %1025 = vdwg.mxu0
        %1027 = vrot.lane.b32.xlu0 %v1023, 16
        %v1028 = vpop.permute.xlu0 %1027
        %v1030 = vadd.f32 %v944, %v1028
        %vm1031 = vcmask 195712
        %1032 = vst.msk [vmem:[#allocation3] sm:$0xff] %vm1031, %v1030
        %v1033 = vld [vmem:[%s726] sm:$0xff]
        %v1034 = vmul.f32 %v1033, %v766
        %v1035 = vld [vmem:[%s324] sm:$0xff]
        %v1036 = vld [vmem:[%s324 + $0x8] sm:$0xff]
        %v1037 = vld [vmem:[#allocation3] sm:$0xff]
        %1040 = vrot.lane.b32.xlu0 %v1035, 104
        %v1041 = vpop.permute.xlu0 %1040
        %1042 = vrot.lane.b32.xlu0 %v1036, 104
        %v1043 = vpop.permute.xlu0 %1042
        %v1047 = vsel %vm456, %v1034, 0
        %1049 = vmatprep.subr.mxu0 0.0
        %1050 = vmatpush1.msra.mxu0 %v1041
        %1051 = vmatprep.subr.mxu0 0.0
        %1052 = vmatpush1.msra.mxu0 %v1043
        %1053 = vmatprep.subr.mxu0 0.0
        %1054 = vmatpush1.msra.mxu0 0.0
        %1055 = vmatprep.subr.mxu0 0.0
        %1056 = vmatpush1.msra.mxu0 0.0
        %1057 = vmatprep.subr.mxu0 0.0
        %1058 = vmatpush1.msra.mxu0 0.0
        %1059 = vmatprep.subr.mxu0 0.0
        %1060 = vmatpush1.msra.mxu0 0.0
        %1061 = vmatprep.subr.mxu0 0.0
        %1062 = vmatpush1.msra.mxu0 0.0
        %1063 = vmatprep.subr.mxu0 0.0
        %1064 = vmatpush1.msra.mxu0 0.0
        %1065 = vmatprep.subr.mxu0 0.0
        %1066 = vmatpush1.msra.mxu0 0.0
        %1067 = vmatprep.subr.mxu0 0.0
        %1068 = vmatpush1.msra.mxu0 0.0
        %1069 = vmatprep.subr.mxu0 0.0
        %1070 = vmatpush1.msra.mxu0 0.0
        %1071 = vmatprep.subr.mxu0 0.0
        %1072 = vmatpush1.msra.mxu0 0.0
        %1073 = vmatprep.subr.mxu0 0.0
        %1074 = vmatpush1.msra.mxu0 0.0
        %1075 = vmatprep.subr.mxu0 0.0
        %1076 = vmatpush1.msra.mxu0 0.0
        %1077 = vmatprep.subr.mxu0 0.0
        %1078 = vmatpush1.msra.mxu0 0.0
        %1079 = vmatprep.subr.mxu0 0.0
        %1080 = vmatpush1.msra.mxu0 0.0
        %1081 = vmatprep.subr.mxu0 0.0
        %1082 = vmatpush1.msra.mxu0 0.0
        %1083 = vmatprep.subr.mxu0 0.0
        %1084 = vmatpush1.msra.mxu0 0.0
        %1085 = vmatprep.subr.mxu0 0.0
        %1086 = vmatpush1.msra.mxu0 0.0
        %1087 = vmatprep.subr.mxu0 0.0
        %1088 = vmatpush1.msra.mxu0 0.0
        %1089 = vmatprep.subr.mxu0 0.0
        %1090 = vmatpush1.msra.mxu0 0.0
        %1091 = vmatprep.subr.mxu0 0.0
        %1092 = vmatpush1.msra.mxu0 0.0
        %1093 = vmatprep.subr.mxu0 0.0
        %1094 = vmatpush1.msra.mxu0 0.0
        %1095 = vmatprep.subr.mxu0 0.0
        %1096 = vmatpush1.msra.mxu0 0.0
        %1097 = vmatprep.subr.mxu0 0.0
        %1098 = vmatpush1.msra.mxu0 0.0
        %1099 = vmatprep.subr.mxu0 0.0
        %1100 = vmatpush1.msra.mxu0 0.0
        %1101 = vmatprep.subr.mxu0 0.0
        %1102 = vmatpush1.msra.mxu0 0.0
        %1103 = vmatprep.subr.mxu0 0.0
        %1104 = vmatpush1.msra.mxu0 0.0
        %1105 = vmatprep.subr.mxu0 0.0
        %1106 = vmatpush1.msra.mxu0 0.0
        %1107 = vmatprep.subr.mxu0 0.0
        %1108 = vmatpush1.msra.mxu0 0.0
        %1109 = vmatprep.subr.mxu0 0.0
        %1110 = vmatpush1.msra.mxu0 0.0
        %1111 = vmatprep.subr.mxu0 0.0
        %1112 = vmatpush1.msra.mxu0 0.0
        %1113 = vmatprep.mubr.f32.mxu0 0.0
        %1114 = vmatmul.mubr.f32.gmra.mrb[0].mxu0 %v1047
        %v1115 = vpop.f32.mrb[0].mxu0
        %v1116 = vadd.f32 0.0, %v1115
        %v1117 = vpop.f32.mrb[0].mxu0
        %1118 = vdwg.mxu0
        %1120 = vrot.lane.b32.xlu0 %v1116, 24
        %v1121 = vpop.permute.xlu0 %1120
        %v1123 = vadd.f32 %v1037, %v1121
        %vm1124 = vcmask 261312
        %1125 = vst.msk [vmem:[#allocation3] sm:$0xff] %vm1124, %v1123
        %p1126 = scmp.eq.s32.totalorder %s33, 1
        // Predicated region
        $region61: #{tpu_custom_call.1} parent=39 // pred_check
          %p1127 = pneg %p1126
        $region62: #{tpu_custom_call.1} parent=39 // pred_check_branch
          %1129 = sbr.rel (%p1127) target = $region64
        $region63: #{tpu_custom_call.1} parent=39 // pred_region
          %v1130 = vld [vmem:[#allocation3] sm:$0xff]
          %v1131 = vld [vmem:[#allocation10] sm:$0xff]
          %v1132 = vld [vmem:[#allocation10 + $0x8] sm:$0xff]
          %v1133 = vld [vmem:[#allocation10 + $0x10] sm:$0xff]
          %v1134 = vld [vmem:[#allocation10 + $0x18] sm:$0xff]
          %v1135 = vld [vmem:[%s4] sm:$0x1]
          %v1137 = vlaneseq
          %v1138 = vshrl.u32 %v1137, 7
          %v1139 = vsub.s32 0, %v1138
          %v1140 = vrot.slane %v1135, %v1139
          %vm1142 = vcmask 261120
          %v1144 = vsel %vm1142, %v1130, 0
          %1146 = vmatprep.subr.mxu0 0.0
          %1147 = vmatpush1.msra.mxu0 %v1131
          %1148 = vmatprep.subr.mxu0 0.0
          %1149 = vmatpush1.msra.mxu0 %v1132
          %1150 = vmatprep.subr.mxu0 0.0
          %1151 = vmatpush1.msra.mxu0 %v1133
          %1152 = vmatprep.subr.mxu0 0.0
          %1153 = vmatpush1.msra.mxu0 %v1134
          %1154 = vmatprep.subr.mxu0 0.0
          %1155 = vmatpush1.msra.mxu0 0.0
          %1156 = vmatprep.subr.mxu0 0.0
          %1157 = vmatpush1.msra.mxu0 0.0
          %1158 = vmatprep.subr.mxu0 0.0
          %1159 = vmatpush1.msra.mxu0 0.0
          %1160 = vmatprep.subr.mxu0 0.0
          %1161 = vmatpush1.msra.mxu0 0.0
          %1162 = vmatprep.subr.mxu0 0.0
          %1163 = vmatpush1.msra.mxu0 0.0
          %1164 = vmatprep.subr.mxu0 0.0
          %1165 = vmatpush1.msra.mxu0 0.0
          %1166 = vmatprep.subr.mxu0 0.0
          %1167 = vmatpush1.msra.mxu0 0.0
          %1168 = vmatprep.subr.mxu0 0.0
          %1169 = vmatpush1.msra.mxu0 0.0
          %1170 = vmatprep.subr.mxu0 0.0
          %1171 = vmatpush1.msra.mxu0 0.0
          %1172 = vmatprep.subr.mxu0 0.0
          %1173 = vmatpush1.msra.mxu0 0.0
          %1174 = vmatprep.subr.mxu0 0.0
          %1175 = vmatpush1.msra.mxu0 0.0
          %1176 = vmatprep.subr.mxu0 0.0
          %1177 = vmatpush1.msra.mxu0 0.0
          %1178 = vmatprep.subr.mxu0 0.0
          %1179 = vmatpush1.msra.mxu0 0.0
          %1180 = vmatprep.subr.mxu0 0.0
          %1181 = vmatpush1.msra.mxu0 0.0
          %1182 = vmatprep.subr.mxu0 0.0
          %1183 = vmatpush1.msra.mxu0 0.0
          %1184 = vmatprep.subr.mxu0 0.0
          %1185 = vmatpush1.msra.mxu0 0.0
          %1186 = vmatprep.subr.mxu0 0.0
          %1187 = vmatpush1.msra.mxu0 0.0
          %1188 = vmatprep.subr.mxu0 0.0
          %1189 = vmatpush1.msra.mxu0 0.0
          %1190 = vmatprep.subr.mxu0 0.0
          %1191 = vmatpush1.msra.mxu0 0.0
          %1192 = vmatprep.subr.mxu0 0.0
          %1193 = vmatpush1.msra.mxu0 0.0
          %1194 = vmatprep.subr.mxu0 0.0
          %1195 = vmatpush1.msra.mxu0 0.0
          %1196 = vmatprep.subr.mxu0 0.0
          %1197 = vmatpush1.msra.mxu0 0.0
          %1198 = vmatprep.subr.mxu0 0.0
          %1199 = vmatpush1.msra.mxu0 0.0
          %1200 = vmatprep.subr.mxu0 0.0
          %1201 = vmatpush1.msra.mxu0 0.0
          %1202 = vmatprep.subr.mxu0 0.0
          %1203 = vmatpush1.msra.mxu0 0.0
          %1204 = vmatprep.subr.mxu0 0.0
          %1205 = vmatpush1.msra.mxu0 0.0
          %1206 = vmatprep.subr.mxu0 0.0
          %1207 = vmatpush1.msra.mxu0 0.0
          %1208 = vmatprep.subr.mxu0 0.0
          %1209 = vmatpush1.msra.mxu0 0.0
          %1210 = vmatprep.mubr.f32.mxu0 0.0
          %1211 = vmatmul.mubr.f32.gmra.mrb[0].mxu0 %v1144
          %v1212 = vpop.f32.mrb[0].mxu0
          %v1213 = vadd.f32 %v1140, %v1212
          %v1214 = vpop.f32.mrb[0].mxu0
          %1215 = vdwg.mxu0
          %1216 = vst.msk [vmem:[%s364] sm:$0xff] %vm1142, %v1213
        $region64: #{tpu_custom_call.1} parent=39 // pred_fallthru
          _
        %s1217 = sand.u32 %s181, 1
        %s1218 = scalar_lea.sflag [#allocation6], %s1217
        %s1219 = sand.u32 %s181, 1
        %s1220 = smul.addr %s1219, 8
        %s1221 = scalar_lea.vmem [#allocation12], %s1220
        // Predicated region
        $region65: #{tpu_custom_call.1} parent=39 // pred_check
          %p1222 = pneg %p191
        $region66: #{tpu_custom_call.1} parent=39 // pred_check_branch
          %1224 = sbr.rel (%p1222) target = $region68
        $region67: #{tpu_custom_call.1} parent=39 // pred_region
          %s1226 = ssub.s32 128, 128
          %1227 = vsyncadd %s1218, %s1226
          %s1228 = smul.addr %s31, 3
          %s1229 = sadd.s32 %s32, %s1228
          %s1230 = smul.addr %s1229, 128
          %s1231 = scalar_lea.hbm %s5, %s1230
          %s1233 = sshll.u32 %s1221, 4
          %s1234 = int_to_ptr.vmem [resolvable:$true] %s1233
          %1236 = dma.vmem_to_hbm [thread:$0]  %s1234, 128, %s1231, %s1218
        $region68: #{tpu_custom_call.1} parent=39 // pred_fallthru
          _
      $region40: #{tpu_custom_call.1} parent=5 // pred_fallthru
        _
      %p1237 = scmp.le.s32.totalorder 2, %s21
      // Predicated region
      $region69: #{tpu_custom_call.1} parent=5 // pred_check
        %p1238 = pneg %p1237
      $region70: #{tpu_custom_call.1} parent=5 // pred_check_branch
        %1240 = sbr.rel (%p1238) target = $region72
      $region71: #{tpu_custom_call.1} parent=5 // pred_region
        %s1241 = ssub.s32 %s21, 2
        // Predicated region
        $region73: #{tpu_custom_call.1} parent=71 // pred_check
          %p1242 = pneg %p197
        $region74: #{tpu_custom_call.1} parent=71 // pred_check_branch
          %1244 = sbr.rel (%p1242) target = $region76
        $region75: #{tpu_custom_call.1} parent=71 // pred_region
          %s1245 = sand.u32 %s182, 1
          %s1246 = scalar_lea.sflag [#allocation6], %s1245
          %s1247 = sand.u32 %s182, 1
          %s1248 = smul.addr %s1247, 8
          %s1249 = scalar_lea.vmem [#allocation12], %s1248
          %1250 = dma.done %s1246, 128
        $region76: #{tpu_custom_call.1} parent=71 // pred_fallthru
          _
      $region72: #{tpu_custom_call.1} parent=5 // pred_fallthru
        _
    $region6: #{tpu_custom_call.1} parent=1 // loop_footer
      %s25 = sadd.s32 1, %s21
    $region7: #{tpu_custom_call.1} parent=1 // loop_footer_branch
      %20 = sbr.rel target = $region3
    $region8: #{tpu_custom_call.1} parent=1 // loop_exit
      _
    %1251 = vsyncpa [#allocation5], 1
    %s1252 = scalar_lea.sflag [#allocation5], 1
    %1253 = vsyncpa %s1252, 1
    %1254 = vsyncpa [#allocation8], 1
    %s1255 = scalar_lea.sflag [#allocation8], 1
    %1256 = vsyncpa %s1255, 1
    %1257 = vsyncpa [#allocation11], 1
    %1258 = vsyncpa [#allocation6], 1
    %s1259 = scalar_lea.sflag [#allocation6], 1
    %1260 = vsyncpa %s1259, 1

</llo_original>
